<compile_context>
chip_gen: v6e
topology: v6e:2x2x1
jax: 0.10.0
libtpu: 0.0.40
codegen_flags: <defaults>
</compile_context>

<pallas_src>
import functools
import math

import jax
import jax.numpy as jnp
from jax.experimental import pallas as pl
from jax.experimental.pallas import tpu as pltpu


# ---------------------------------------------------------------------------
# Fused Inception kernel
# ---------------------------------------------------------------------------

def _inception_kernel(x_ref, wm_ref, bm_ref, w2_ref, b2_ref, w3_ref, b3_ref,
                      w4_ref, b4_ref, o_ref, *,
                      H, W, TH, WP, C1, C2a, C2b, C3a, C3b, direct_store):
    """One (batch, row-tile) step of the fused Inception block.

    x_ref : (1, Cin, (H_pad+5)*WP) bf16, zero-padded (top 2 / bottom H_pad-H+3,
            left 2), width padded to WP (pow2), row-major flattened.
    wm_ref: (C1+C2a+C3a, Cin)  merged 1x1 weights (branch1 | branch2a | branch3a)
    w2_ref: (C2b, 9*C2a)       3x3 weights, K ordered (kh, kw, cin)
    w3_ref: (5, C3b, 5*C3a)    5x5 weights, per-kh, K ordered (kw, cin)
    w4_ref: (C4, Cin)          pool-branch 1x1 weights
    b*_ref: (Cout, 1) f32 biases
    o_ref : (1, Ctot, TH*WP)   channel-major, lane-dense output tile
    """
    S = TH * WP                      # flat spatial size of one output row-tile
    SL = (TH + 5) * WP               # slab = TH output rows + 2-top/3-bottom halo
    wp_shift = WP.bit_length() - 1   # WP is a power of two

    ht = pl.program_id(1)
    r0 = ht * TH                                   # first output row of tile
    start = pl.multiple_of(ht * S, S)              # slab start in the flat image

    # (Cin, SL) slab of the padded input (bf16), resident in VMEM.
    slab = x_ref[0, :, pl.ds(start, SL)]

    # Validity mask: does a slab position lie inside the true H x W image?
    pos = jax.lax.broadcasted_iota(jnp.int32, (1, SL), 1)
    row = r0 - 2 + (pos >> wp_shift)               # true image row
    col = (pos & (WP - 1)) - 2                     # true image col
    valid = (row >= 0) & (row < H) & (col >= 0) & (col < W)

    def tap(arr, a, b):
        # Value of `arr` at (output pixel + offset (a, b)) for every output
        # position of this tile -- a contiguous lane slice of the flat slab.
        s = (a + 2) * WP + (b + 2)
        return arr[:, s:s + S]

    # ---- merged 1x1 convs (branch1 + branch2-reduce + branch3-reduce) ------
    pm = jnp.dot(wm_ref[...], slab, preferred_element_type=jnp.float32)
    pm = jnp.maximum(pm + bm_ref[...], 0.0)

    # ---- branch 1: its (0, 0) tap is already the final output --------------
    r1 = tap(pm[:C1], 0, 0)

    # ---- branch 2: zero the out-of-image halo, 3x3 conv as one matmul ------
    p2 = jnp.where(valid, pm[C1:C1 + C2a], 0.0).astype(jnp.bfloat16)
    col2 = jnp.concatenate(
        [tap(p2, kh - 1, kw - 1) for kh in range(3) for kw in range(3)], axis=0)
    r2 = jnp.dot(w2_ref[...], col2, preferred_element_type=jnp.float32)
    r2 = jnp.maximum(r2 + b2_ref[...], 0.0)

    # ---- branch 3: 5x5 conv, accumulated per kernel row (lower peak VMEM) ---
    p3 = jnp.where(valid, pm[C1 + C2a:], 0.0).astype(jnp.bfloat16)
    r3 = jnp.zeros((C3b, S), jnp.float32)
    for kh in range(5):
        colk = jnp.concatenate(
            [tap(p3, kh - 2, kw - 2) for kw in range(5)], axis=0)
        r3 = r3 + jnp.dot(w3_ref[kh], colk, preferred_element_type=jnp.float32)
    r3 = jnp.maximum(r3 + b3_ref[...], 0.0)

    # ---- branch 4: separable 3x3 max-pool (bf16) then 1x1 conv --------------
    xq = jnp.where(valid, slab, -jnp.inf)          # stays bf16 (weak scalar)
    # horizontal 3-tap max: hm[p] = max(xq[p], xq[p+1], xq[p+2])
    hm = jnp.maximum(jnp.maximum(xq[:, 0:SL - 2], xq[:, 1:SL - 1]), xq[:, 2:SL])
    # vertical 3-tap max over rows (-1, 0, +1) of the horizontal result
    pooled = jnp.maximum(
        jnp.maximum(hm[:, WP + 1:WP + 1 + S],
                    hm[:, 2 * WP + 1:2 * WP + 1 + S]),
        hm[:, 3 * WP + 1:3 * WP + 1 + S])
    r4 = jnp.dot(w4_ref[...], pooled.astype(jnp.bfloat16),
                 preferred_element_type=jnp.float32)
    r4 = jnp.maximum(r4 + b4_ref[...], 0.0)

    # ---- lane-dense stores of the pre-concatenated output -------------------
    od = o_ref.dtype
    if direct_store:
        o_ref[0, 0:C1, :] = r1.astype(od)
        o_ref[0, C1:C1 + C2b, :] = r2.astype(od)
        o_ref[0, C1 + C2b:C1 + C2b + C3b, :] = r3.astype(od)
        o_ref[0, C1 + C2b + C3b:, :] = r4.astype(od)
    else:
        o_ref[0] = jnp.concatenate([r1, r2, r3, r4], axis=0).astype(od)


# ---------------------------------------------------------------------------
# Wrapper: tiling choice, weight packing, pallas_call
# ---------------------------------------------------------------------------

def _pick_tiling(H, W, s_lo=512, s_hi=2048):
    """Padded width WP (pow2 >= W+4) and a row tile TH with TH*WP % 128 == 0,
    targeting S = TH*WP in [s_lo, s_hi] and minimal padded-row waste."""
    WP = pl.next_power_of_2(W + 4)
    q = max(1, 128 // math.gcd(WP, 128))       # TH must be a multiple of q
    th_full = pl.cdiv(H, q) * q                # single tile covering all rows
    cands = []
    th = q
    while th <= th_full:
        s = th * WP
        if s <= s_hi and (s >= s_lo or th == th_full):
            cands.append(th)
        th += q
    if not cands:                              # extremely wide W: smallest tile
        cands = [q]
    best_th, best_key = None, None
    for th in cands:
        waste = pl.cdiv(H, th) * th - H
        key = (waste, -th)                     # min waste, then max TH
        if best_key is None or key < best_key:
            best_key, best_th = key, th
    return best_th, WP


def inception_pallas(x_nchw, params, *, out_dtype=jnp.bfloat16):
    N, Cin, H, W = x_nchw.shape
    C1 = params["b1_b"].shape[0]
    C2a, C2b = params["b2a_b"].shape[0], params["b2b_b"].shape[0]
    C3a, C3b = params["b3a_b"].shape[0], params["b3b_b"].shape[0]
    C4 = params["b4_b"].shape[0]
    Csum1 = C1 + C2a + C3a
    Ctot = C1 + C2b + C3b + C4

    TH, WP = _pick_tiling(H, W)
    NT = pl.cdiv(H, TH)
    H_pad = NT * TH
    HP = H_pad + 5
    S = TH * WP
    SL = (TH + 5) * WP

    # Per-branch direct stores only when every branch boundary is aligned to
    # the output dtype's sublane packing (16 rows for 16-bit, 8 for 32-bit).
    out_bytes = jnp.dtype(out_dtype).itemsize
    align = 16 if out_bytes == 2 else 8
    direct_store = all(c % align == 0 for c in (C1, C2b, C3b, C4))

    # TODO(synk): for chained Inception blocks, keep activations in this padded
    # flat (N, C, HP*WP) layout between blocks so the pad below and the final
    # slice are paid once per network, not once per block.  For very large
    # feature maps on v7x, switch the input to manual halo DMA (pl.ANY +
    # make_async_copy of (TH+5)-row slabs) so VMEM scales with TH.
    xp = jnp.pad(x_nchw.astype(jnp.bfloat16),
                 ((0, 0), (0, 0), (2, H_pad - H + 3), (2, WP - W - 2)))
    xp = xp.reshape(N, Cin, HP * WP)

    bf16, f32 = jnp.bfloat16, jnp.float32
    wm = jnp.concatenate([params["b1_w"][0, 0], params["b2a_w"][0, 0],
                          params["b3a_w"][0, 0]], axis=-1).T.astype(bf16)
    bm = jnp.concatenate([params["b1_b"], params["b2a_b"],
                          params["b3a_b"]])[:, None].astype(f32)
    w2 = params["b2b_w"].reshape(9 * C2a, C2b).T.astype(bf16)
    b2 = params["b2b_b"][:, None].astype(f32)
    w3 = jnp.transpose(params["b3b_w"].reshape(5, 5 * C3a, C3b),
                       (0, 2, 1)).astype(bf16)           # (kh, Cout, kw*Cin)
    b3 = params["b3b_b"][:, None].astype(f32)
    w4 = params["b4_w"][0, 0].T.astype(bf16)
    b4 = params["b4_b"][:, None].astype(f32)

    kernel = functools.partial(
        _inception_kernel, H=H, W=W, TH=TH, WP=WP, C1=C1, C2a=C2a, C2b=C2b,
        C3a=C3a, C3b=C3b, direct_store=direct_store)

    def _const_spec(shape):
        rank = len(shape)
        return pl.BlockSpec(shape, lambda n, t, _r=rank: (0,) * _r)

    # VMEM budget from the actual block / intermediate sizes (+ headroom),
    # capped at 64 MiB so the request is safe on v7x as well.
    est = (2 * Cin * HP * WP * 2                          # input block x2 bufs
           + 2 * Ctot * S * out_bytes                     # output block x2 bufs
           + 2 * 4 * (Csum1 * Cin + 9 * C2a * C2b + 25 * C3a * C3b + Cin * C4
                      + Csum1 + C2b + C3b + C4)           # weights/biases
           + Csum1 * SL * 4 + (C2a + C3a) * SL * 2        # pm, p2/p3
           + 2 * Cin * SL * 2                             # xq, hm
           + max(9 * C2a, 5 * C3a) * S * 2                # im2col peak
           + Ctot * S * 4)                                # branch results
    vmem_limit = int(min(max(1.5 * est + (4 << 20), 32 << 20), 64 << 20))

    out_flat = pl.pallas_call(
        kernel,
        out_shape=jax.ShapeDtypeStruct((N, Ctot, H_pad * WP), out_dtype),
        grid=(N, NT),
        in_specs=[
            pl.BlockSpec((1, Cin, HP * WP), lambda n, t: (n, 0, 0)),
            _const_spec((Csum1, Cin)),
            _const_spec((Csum1, 1)),
            _const_spec((C2b, 9 * C2a)),
            _const_spec((C2b, 1)),
            _const_spec((5, C3b, 5 * C3a)),
            _const_spec((C3b, 1)),
            _const_spec((C4, Cin)),
            _const_spec((C4, 1)),
        ],
        out_specs=pl.BlockSpec((1, Ctot, S), lambda n, t: (n, 0, t)),
        compiler_params=pltpu.CompilerParams(
            dimension_semantics=("parallel", "parallel"),
            vmem_limit_bytes=vmem_limit),
    )(xp, wm, bm, w2, b2, w3, b3, w4, b4)

    # Drop padded rows / width-padding columns; channel order is already NCHW.
    return out_flat.reshape(N, Ctot, H_pad, WP)[:, :, :H, :W]


@jax.jit
def inception_forward(x_nchw, params):
    return inception_pallas(x_nchw, params)


# ---------------------------------------------------------------------------
# Parameter init (HWIO conv weights, like nn.Conv2d + bias)
# ---------------------------------------------------------------------------

def init_inception_params(key, in_channels, c1, c13, c15, c31):
    ks = jax.random.split(key, 12)

    def wconv(k, kh, kw, cin, cout):
        return 0.1 * jax.random.normal(k, (kh, kw, cin, cout), jnp.float32)

    def wbias(k, cout):
        return 0.05 * jax.random.normal(k, (cout,), jnp.float32)

    return {
        "b1_w": wconv(ks[0], 1, 1, in_channels, c1),      "b1_b": wbias(ks[1], c1),
        "b2a_w": wconv(ks[2], 1, 1, in_channels, c13[0]), "b2a_b": wbias(ks[3], c13[0]),
        "b2b_w": wconv(ks[4], 3, 3, c13[0], c13[1]),      "b2b_b": wbias(ks[5], c13[1]),
        "b3a_w": wconv(ks[6], 1, 1, in_channels, c15[0]), "b3a_b": wbias(ks[7], c15[0]),
        "b3b_w": wconv(ks[8], 5, 5, c15[0], c15[1]),      "b3b_b": wbias(ks[9], c15[1]),
        "b4_w": wconv(ks[10], 1, 1, in_channels, c31),    "b4_b": wbias(ks[11], c31),
    }


# ---------------------------------------------------------------------------
# Pure-JAX reference (verification only) -- mirrors the bf16 matmul inputs
# ---------------------------------------------------------------------------

def _ref_conv(x_nhwc, w, b, pad):
    out = jax.lax.conv_general_dilated(
        x_nhwc.astype(jnp.bfloat16), w.astype(jnp.bfloat16),
        window_strides=(1, 1), padding=[(pad, pad), (pad, pad)],
        dimension_numbers=("NHWC", "HWIO", "NHWC"),
        preferred_element_type=jnp.float32)
    return jnp.maximum(out + b, 0.0)


def _ref_forward(x_nchw, p):
    x = jnp.transpose(x_nchw, (0, 2, 3, 1)).astype(jnp.float32)
    br1 = _ref_conv(x, p["b1_w"], p["b1_b"], 0)
    br2 = _ref_conv(_ref_conv(x, p["b2a_w"], p["b2a_b"], 0),
                    p["b2b_w"], p["b2b_b"], 1)
    br3 = _ref_conv(_ref_conv(x, p["b3a_w"], p["b3a_b"], 0),
                    p["b3b_w"], p["b3b_b"], 2)
    pooled = jax.lax.reduce_window(
        x, -jnp.inf, jax.lax.max, (1, 3, 3, 1), (1, 1, 1, 1),
        [(0, 0), (1, 1), (1, 1), (0, 0)])
    br4 = _ref_conv(pooled, p["b4_w"], p["b4_b"], 0)
    out = jnp.concatenate([br1, br2, br3, br4], axis=-1)
    return jnp.transpose(out, (0, 3, 1, 2))


if __name__ == "__main__":
    key = jax.random.PRNGKey(0)
    k_x, k_p = jax.random.split(key)

    # Small config with branch widths that are multiples of 16 so the
    # direct-per-branch-store path (the optimized one) is exercised.
    N, Cin, H, W = 2, 8, 16, 16
    c1, c13, c15, c31 = 16, (8, 16), (8, 16), 16

    x = jax.random.normal(k_x, (N, Cin, H, W), jnp.float32)
    params = init_inception_params(k_p, Cin, c1, c13, c15, c31)

    out = inception_forward(x, params)
    out = jax.block_until_ready(out)

    Ctot = c1 + c13[1] + c15[1] + c31
    assert out.shape == (N, Ctot, H, W), out.shape

    ref = _ref_forward(x, params)
    out_f32 = out.astype(jnp.float32)
    assert jnp.allclose(out_f32, ref, atol=3e-2, rtol=3e-2), \
        float(jnp.max(jnp.abs(out_f32 - ref)))

    print("KERNEL_OK")
</pallas_src>

<mosaic_0001>
module attributes {stable_mosaic.version = 11 : i64} {
  func.func @_inception_kernel(%arg0: i32, %arg1: i32, %arg2: memref<1x8x672xbf16, #tpu.memory_space<vmem>>, %arg3: memref<32x8xbf16, #tpu.memory_space<vmem>>, %arg4: memref<32x1xf32, #tpu.memory_space<vmem>>, %arg5: memref<16x72xbf16, #tpu.memory_space<vmem>>, %arg6: memref<16x1xf32, #tpu.memory_space<vmem>>, %arg7: memref<5x16x40xbf16, #tpu.memory_space<vmem>>, %arg8: memref<16x1xf32, #tpu.memory_space<vmem>>, %arg9: memref<16x8xbf16, #tpu.memory_space<vmem>>, %arg10: memref<16x1xf32, #tpu.memory_space<vmem>>, %arg11: memref<1x64x512xbf16, #tpu.memory_space<vmem>>) attributes {dimension_semantics = [#tpu.dimension_semantics<parallel>, #tpu.dimension_semantics<parallel>], iteration_bounds = array<i64: 2, 1>, scalar_prefetch = 0 : i64, scratch_operands = 0 : i64, tpu.core_type = #tpu.core_type<tc>, window_params = [{transform_indices = @transform_0, window_bounds = array<i64: 1, 8, 672>}, {pipeline_mode = #tpu.pipeline_mode<synchronous>, transform_indices = @transform_1, window_bounds = array<i64: 32, 8>}, {pipeline_mode = #tpu.pipeline_mode<synchronous>, transform_indices = @transform_2, window_bounds = array<i64: 32, 1>}, {pipeline_mode = #tpu.pipeline_mode<synchronous>, transform_indices = @transform_3, window_bounds = array<i64: 16, 72>}, {pipeline_mode = #tpu.pipeline_mode<synchronous>, transform_indices = @transform_4, window_bounds = array<i64: 16, 1>}, {pipeline_mode = #tpu.pipeline_mode<synchronous>, transform_indices = @transform_5, window_bounds = array<i64: 5, 16, 40>}, {pipeline_mode = #tpu.pipeline_mode<synchronous>, transform_indices = @transform_6, window_bounds = array<i64: 16, 1>}, {pipeline_mode = #tpu.pipeline_mode<synchronous>, transform_indices = @transform_7, window_bounds = array<i64: 16, 8>}, {pipeline_mode = #tpu.pipeline_mode<synchronous>, transform_indices = @transform_8, window_bounds = array<i64: 16, 1>}, {transform_indices = @transform_9, window_bounds = array<i64: 1, 64, 512>}]} {
    %c16_i32 = arith.constant 16 : i32
    %0 = arith.muli %arg1, %c16_i32 : i32
    %c512_i32 = arith.constant 512 : i32
    %1 = arith.muli %arg1, %c512_i32 : i32
    %2 = tpu.assume_multiple %1, 512 : i32
    %c0 = arith.constant 0 : index
    %c0_0 = arith.constant 0 : index
    %3 = arith.index_cast %2 : i32 to index
    %4 = vector.load %arg2[%c0, %c0_0, %3] : memref<1x8x672xbf16, #tpu.memory_space<vmem>>, vector<1x8x672xbf16>
    %5 = vector.shape_cast %4 : vector<1x8x672xbf16> to vector<8x672xbf16>
    %6 = tpu.iota {dimensions = array<i32: 1>} : vector<1x672xi32>
    %c2_i32 = arith.constant 2 : i32
    %7 = arith.subi %0, %c2_i32 : i32
    %c5_i32 = arith.constant 5 : i32
    %8 = vector.broadcast %c5_i32 : i32 to vector<1x672xi32>
    %9 = arith.shrsi %6, %8 : vector<1x672xi32>
    %10 = vector.broadcast %7 : i32 to vector<1x672xi32>
    %11 = arith.addi %10, %9 : vector<1x672xi32>
    %c31_i32 = arith.constant 31 : i32
    %12 = vector.broadcast %c31_i32 : i32 to vector<1x672xi32>
    %13 = arith.andi %6, %12 : vector<1x672xi32>
    %c2_i32_1 = arith.constant 2 : i32
    %14 = vector.broadcast %c2_i32_1 : i32 to vector<1x672xi32>
    %15 = arith.subi %13, %14 : vector<1x672xi32>
    %c0_i32 = arith.constant 0 : i32
    %16 = vector.broadcast %c0_i32 : i32 to vector<1x672xi32>
    %17 = arith.cmpi sge, %11, %16 : vector<1x672xi32>
    %c16_i32_2 = arith.constant 16 : i32
    %18 = vector.broadcast %c16_i32_2 : i32 to vector<1x672xi32>
    %19 = arith.cmpi slt, %11, %18 : vector<1x672xi32>
    %20 = arith.andi %17, %19 : vector<1x672xi1>
    %c0_i32_3 = arith.constant 0 : i32
    %21 = vector.broadcast %c0_i32_3 : i32 to vector<1x672xi32>
    %22 = arith.cmpi sge, %15, %21 : vector<1x672xi32>
    %23 = arith.andi %20, %22 : vector<1x672xi1>
    %c16_i32_4 = arith.constant 16 : i32
    %24 = vector.broadcast %c16_i32_4 : i32 to vector<1x672xi32>
    %25 = arith.cmpi slt, %15, %24 : vector<1x672xi32>
    %26 = arith.andi %23, %25 : vector<1x672xi1>
    %c0_5 = arith.constant 0 : index
    %c0_6 = arith.constant 0 : index
    %27 = vector.load %arg3[%c0_5, %c0_6] : memref<32x8xbf16, #tpu.memory_space<vmem>>, vector<32x8xbf16>
    %cst = arith.constant dense<0.000000e+00> : vector<32x672xf32>
    %28 = tpu.matmul %27, %5, %cst {dimension_numbers = #tpu.dot_dimension_numbers<[1], [0], [0], [1], [0, 0, 1, 1], [], []>} : vector<32x8xbf16>, vector<8x672xbf16>, vector<32x672xf32> -> vector<32x672xf32>
    %c0_7 = arith.constant 0 : index
    %c0_8 = arith.constant 0 : index
    %29 = vector.load %arg4[%c0_7, %c0_8] : memref<32x1xf32, #tpu.memory_space<vmem>>, vector<32x1xf32>
    %30 = vector.broadcast %29 : vector<32x1xf32> to vector<32x672xf32>
    %31 = arith.addf %28, %30 : vector<32x672xf32>
    %cst_9 = arith.constant 0.000000e+00 : f32
    %32 = vector.broadcast %cst_9 : f32 to vector<32x672xf32>
    %33 = arith.maximumf %31, %32 : vector<32x672xf32>
    %34 = vector.extract_strided_slice %33 {offsets = [0, 0], sizes = [16, 672], strides = [1, 1]} : vector<32x672xf32> to vector<16x672xf32>
    %35 = vector.extract_strided_slice %34 {offsets = [0, 66], sizes = [16, 512], strides = [1, 1]} : vector<16x672xf32> to vector<16x512xf32>
    %36 = vector.extract_strided_slice %33 {offsets = [16, 0], sizes = [8, 672], strides = [1, 1]} : vector<32x672xf32> to vector<8x672xf32>
    %cst_10 = arith.constant 0.000000e+00 : f32
    %37 = vector.shape_cast %26 : vector<1x672xi1> to vector<1x672xi1>
    %38 = vector.broadcast %37 : vector<1x672xi1> to vector<8x672xi1>
    %39 = vector.broadcast %cst_10 : f32 to vector<8x672xf32>
    %40 = arith.select %38, %36, %39 : vector<8x672xi1>, vector<8x672xf32>
    %41 = arith.truncf %40 : vector<8x672xf32> to vector<8x672xbf16>
    %42 = vector.extract_strided_slice %41 {offsets = [0, 33], sizes = [8, 512], strides = [1, 1]} : vector<8x672xbf16> to vector<8x512xbf16>
    %43 = vector.extract_strided_slice %41 {offsets = [0, 34], sizes = [8, 512], strides = [1, 1]} : vector<8x672xbf16> to vector<8x512xbf16>
    %44 = vector.extract_strided_slice %41 {offsets = [0, 35], sizes = [8, 512], strides = [1, 1]} : vector<8x672xbf16> to vector<8x512xbf16>
    %45 = vector.extract_strided_slice %41 {offsets = [0, 65], sizes = [8, 512], strides = [1, 1]} : vector<8x672xbf16> to vector<8x512xbf16>
    %46 = vector.extract_strided_slice %41 {offsets = [0, 66], sizes = [8, 512], strides = [1, 1]} : vector<8x672xbf16> to vector<8x512xbf16>
    %47 = vector.extract_strided_slice %41 {offsets = [0, 67], sizes = [8, 512], strides = [1, 1]} : vector<8x672xbf16> to vector<8x512xbf16>
    %48 = vector.extract_strided_slice %41 {offsets = [0, 97], sizes = [8, 512], strides = [1, 1]} : vector<8x672xbf16> to vector<8x512xbf16>
    %49 = vector.extract_strided_slice %41 {offsets = [0, 98], sizes = [8, 512], strides = [1, 1]} : vector<8x672xbf16> to vector<8x512xbf16>
    %50 = vector.extract_strided_slice %41 {offsets = [0, 99], sizes = [8, 512], strides = [1, 1]} : vector<8x672xbf16> to vector<8x512xbf16>
    %51 = tpu.concatenate %42, %43, %44, %45, %46, %47, %48, %49, %50 in 0 : vector<8x512xbf16>, vector<8x512xbf16>, vector<8x512xbf16>, vector<8x512xbf16>, vector<8x512xbf16>, vector<8x512xbf16>, vector<8x512xbf16>, vector<8x512xbf16>, vector<8x512xbf16> -> vector<72x512xbf16>
    %c0_11 = arith.constant 0 : index
    %c0_12 = arith.constant 0 : index
    %52 = vector.load %arg5[%c0_11, %c0_12] : memref<16x72xbf16, #tpu.memory_space<vmem>>, vector<16x72xbf16>
    %cst_13 = arith.constant dense<0.000000e+00> : vector<16x512xf32>
    %53 = tpu.matmul %52, %51, %cst_13 {dimension_numbers = #tpu.dot_dimension_numbers<[1], [0], [0], [1], [0, 0, 1, 1], [], []>} : vector<16x72xbf16>, vector<72x512xbf16>, vector<16x512xf32> -> vector<16x512xf32>
    %c0_14 = arith.constant 0 : index
    %c0_15 = arith.constant 0 : index
    %54 = vector.load %arg6[%c0_14, %c0_15] : memref<16x1xf32, #tpu.memory_space<vmem>>, vector<16x1xf32>
    %55 = vector.broadcast %54 : vector<16x1xf32> to vector<16x512xf32>
    %56 = arith.addf %53, %55 : vector<16x512xf32>
    %cst_16 = arith.constant 0.000000e+00 : f32
    %57 = vector.broadcast %cst_16 : f32 to vector<16x512xf32>
    %58 = arith.maximumf %56, %57 : vector<16x512xf32>
    %59 = vector.extract_strided_slice %33 {offsets = [24, 0], sizes = [8, 672], strides = [1, 1]} : vector<32x672xf32> to vector<8x672xf32>
    %cst_17 = arith.constant 0.000000e+00 : f32
    %60 = vector.shape_cast %26 : vector<1x672xi1> to vector<1x672xi1>
    %61 = vector.broadcast %60 : vector<1x672xi1> to vector<8x672xi1>
    %62 = vector.broadcast %cst_17 : f32 to vector<8x672xf32>
    %63 = arith.select %61, %59, %62 : vector<8x672xi1>, vector<8x672xf32>
    %64 = arith.truncf %63 : vector<8x672xf32> to vector<8x672xbf16>
    %cst_18 = arith.constant 0.000000e+00 : f32
    %65 = vector.broadcast %cst_18 : f32 to vector<16x512xf32>
    %66 = vector.extract_strided_slice %64 {offsets = [0, 0], sizes = [8, 512], strides = [1, 1]} : vector<8x672xbf16> to vector<8x512xbf16>
    %67 = vector.extract_strided_slice %64 {offsets = [0, 1], sizes = [8, 512], strides = [1, 1]} : vector<8x672xbf16> to vector<8x512xbf16>
    %68 = vector.extract_strided_slice %64 {offsets = [0, 2], sizes = [8, 512], strides = [1, 1]} : vector<8x672xbf16> to vector<8x512xbf16>
    %69 = vector.extract_strided_slice %64 {offsets = [0, 3], sizes = [8, 512], strides = [1, 1]} : vector<8x672xbf16> to vector<8x512xbf16>
    %70 = vector.extract_strided_slice %64 {offsets = [0, 4], sizes = [8, 512], strides = [1, 1]} : vector<8x672xbf16> to vector<8x512xbf16>
    %71 = tpu.concatenate %66, %67, %68, %69, %70 in 0 : vector<8x512xbf16>, vector<8x512xbf16>, vector<8x512xbf16>, vector<8x512xbf16>, vector<8x512xbf16> -> vector<40x512xbf16>
    %c0_19 = arith.constant 0 : index
    %c0_20 = arith.constant 0 : index
    %c0_21 = arith.constant 0 : index
    %72 = vector.load %arg7[%c0_19, %c0_20, %c0_21] : memref<5x16x40xbf16, #tpu.memory_space<vmem>>, vector<1x16x40xbf16>
    %73 = vector.shape_cast %72 : vector<1x16x40xbf16> to vector<16x40xbf16>
    %cst_22 = arith.constant dense<0.000000e+00> : vector<16x512xf32>
    %74 = tpu.matmul %73, %71, %cst_22 {dimension_numbers = #tpu.dot_dimension_numbers<[1], [0], [0], [1], [0, 0, 1, 1], [], []>} : vector<16x40xbf16>, vector<40x512xbf16>, vector<16x512xf32> -> vector<16x512xf32>
    %75 = arith.addf %65, %74 : vector<16x512xf32>
    %76 = vector.extract_strided_slice %64 {offsets = [0, 32], sizes = [8, 512], strides = [1, 1]} : vector<8x672xbf16> to vector<8x512xbf16>
    %77 = vector.extract_strided_slice %64 {offsets = [0, 33], sizes = [8, 512], strides = [1, 1]} : vector<8x672xbf16> to vector<8x512xbf16>
    %78 = vector.extract_strided_slice %64 {offsets = [0, 34], sizes = [8, 512], strides = [1, 1]} : vector<8x672xbf16> to vector<8x512xbf16>
    %79 = vector.extract_strided_slice %64 {offsets = [0, 35], sizes = [8, 512], strides = [1, 1]} : vector<8x672xbf16> to vector<8x512xbf16>
    %80 = vector.extract_strided_slice %64 {offsets = [0, 36], sizes = [8, 512], strides = [1, 1]} : vector<8x672xbf16> to vector<8x512xbf16>
    %81 = tpu.concatenate %76, %77, %78, %79, %80 in 0 : vector<8x512xbf16>, vector<8x512xbf16>, vector<8x512xbf16>, vector<8x512xbf16>, vector<8x512xbf16> -> vector<40x512xbf16>
    %c1 = arith.constant 1 : index
    %c0_23 = arith.constant 0 : index
    %c0_24 = arith.constant 0 : index
    %82 = vector.load %arg7[%c1, %c0_23, %c0_24] : memref<5x16x40xbf16, #tpu.memory_space<vmem>>, vector<1x16x40xbf16>
    %83 = vector.shape_cast %82 : vector<1x16x40xbf16> to vector<16x40xbf16>
    %cst_25 = arith.constant dense<0.000000e+00> : vector<16x512xf32>
    %84 = tpu.matmul %83, %81, %cst_25 {dimension_numbers = #tpu.dot_dimension_numbers<[1], [0], [0], [1], [0, 0, 1, 1], [], []>} : vector<16x40xbf16>, vector<40x512xbf16>, vector<16x512xf32> -> vector<16x512xf32>
    %85 = arith.addf %75, %84 : vector<16x512xf32>
    %86 = vector.extract_strided_slice %64 {offsets = [0, 64], sizes = [8, 512], strides = [1, 1]} : vector<8x672xbf16> to vector<8x512xbf16>
    %87 = vector.extract_strided_slice %64 {offsets = [0, 65], sizes = [8, 512], strides = [1, 1]} : vector<8x672xbf16> to vector<8x512xbf16>
    %88 = vector.extract_strided_slice %64 {offsets = [0, 66], sizes = [8, 512], strides = [1, 1]} : vector<8x672xbf16> to vector<8x512xbf16>
    %89 = vector.extract_strided_slice %64 {offsets = [0, 67], sizes = [8, 512], strides = [1, 1]} : vector<8x672xbf16> to vector<8x512xbf16>
    %90 = vector.extract_strided_slice %64 {offsets = [0, 68], sizes = [8, 512], strides = [1, 1]} : vector<8x672xbf16> to vector<8x512xbf16>
    %91 = tpu.concatenate %86, %87, %88, %89, %90 in 0 : vector<8x512xbf16>, vector<8x512xbf16>, vector<8x512xbf16>, vector<8x512xbf16>, vector<8x512xbf16> -> vector<40x512xbf16>
    %c2 = arith.constant 2 : index
    %c0_26 = arith.constant 0 : index
    %c0_27 = arith.constant 0 : index
    %92 = vector.load %arg7[%c2, %c0_26, %c0_27] : memref<5x16x40xbf16, #tpu.memory_space<vmem>>, vector<1x16x40xbf16>
    %93 = vector.shape_cast %92 : vector<1x16x40xbf16> to vector<16x40xbf16>
    %cst_28 = arith.constant dense<0.000000e+00> : vector<16x512xf32>
    %94 = tpu.matmul %93, %91, %cst_28 {dimension_numbers = #tpu.dot_dimension_numbers<[1], [0], [0], [1], [0, 0, 1, 1], [], []>} : vector<16x40xbf16>, vector<40x512xbf16>, vector<16x512xf32> -> vector<16x512xf32>
    %95 = arith.addf %85, %94 : vector<16x512xf32>
    %96 = vector.extract_strided_slice %64 {offsets = [0, 96], sizes = [8, 512], strides = [1, 1]} : vector<8x672xbf16> to vector<8x512xbf16>
    %97 = vector.extract_strided_slice %64 {offsets = [0, 97], sizes = [8, 512], strides = [1, 1]} : vector<8x672xbf16> to vector<8x512xbf16>
    %98 = vector.extract_strided_slice %64 {offsets = [0, 98], sizes = [8, 512], strides = [1, 1]} : vector<8x672xbf16> to vector<8x512xbf16>
    %99 = vector.extract_strided_slice %64 {offsets = [0, 99], sizes = [8, 512], strides = [1, 1]} : vector<8x672xbf16> to vector<8x512xbf16>
    %100 = vector.extract_strided_slice %64 {offsets = [0, 100], sizes = [8, 512], strides = [1, 1]} : vector<8x672xbf16> to vector<8x512xbf16>
    %101 = tpu.concatenate %96, %97, %98, %99, %100 in 0 : vector<8x512xbf16>, vector<8x512xbf16>, vector<8x512xbf16>, vector<8x512xbf16>, vector<8x512xbf16> -> vector<40x512xbf16>
    %c3 = arith.constant 3 : index
    %c0_29 = arith.constant 0 : index
    %c0_30 = arith.constant 0 : index
    %102 = vector.load %arg7[%c3, %c0_29, %c0_30] : memref<5x16x40xbf16, #tpu.memory_space<vmem>>, vector<1x16x40xbf16>
    %103 = vector.shape_cast %102 : vector<1x16x40xbf16> to vector<16x40xbf16>
    %cst_31 = arith.constant dense<0.000000e+00> : vector<16x512xf32>
    %104 = tpu.matmul %103, %101, %cst_31 {dimension_numbers = #tpu.dot_dimension_numbers<[1], [0], [0], [1], [0, 0, 1, 1], [], []>} : vector<16x40xbf16>, vector<40x512xbf16>, vector<16x512xf32> -> vector<16x512xf32>
    %105 = arith.addf %95, %104 : vector<16x512xf32>
    %106 = vector.extract_strided_slice %64 {offsets = [0, 128], sizes = [8, 512], strides = [1, 1]} : vector<8x672xbf16> to vector<8x512xbf16>
    %107 = vector.extract_strided_slice %64 {offsets = [0, 129], sizes = [8, 512], strides = [1, 1]} : vector<8x672xbf16> to vector<8x512xbf16>
    %108 = vector.extract_strided_slice %64 {offsets = [0, 130], sizes = [8, 512], strides = [1, 1]} : vector<8x672xbf16> to vector<8x512xbf16>
    %109 = vector.extract_strided_slice %64 {offsets = [0, 131], sizes = [8, 512], strides = [1, 1]} : vector<8x672xbf16> to vector<8x512xbf16>
    %110 = vector.extract_strided_slice %64 {offsets = [0, 132], sizes = [8, 512], strides = [1, 1]} : vector<8x672xbf16> to vector<8x512xbf16>
    %111 = tpu.concatenate %106, %107, %108, %109, %110 in 0 : vector<8x512xbf16>, vector<8x512xbf16>, vector<8x512xbf16>, vector<8x512xbf16>, vector<8x512xbf16> -> vector<40x512xbf16>
    %c4 = arith.constant 4 : index
    %c0_32 = arith.constant 0 : index
    %c0_33 = arith.constant 0 : index
    %112 = vector.load %arg7[%c4, %c0_32, %c0_33] : memref<5x16x40xbf16, #tpu.memory_space<vmem>>, vector<1x16x40xbf16>
    %113 = vector.shape_cast %112 : vector<1x16x40xbf16> to vector<16x40xbf16>
    %cst_34 = arith.constant dense<0.000000e+00> : vector<16x512xf32>
    %114 = tpu.matmul %113, %111, %cst_34 {dimension_numbers = #tpu.dot_dimension_numbers<[1], [0], [0], [1], [0, 0, 1, 1], [], []>} : vector<16x40xbf16>, vector<40x512xbf16>, vector<16x512xf32> -> vector<16x512xf32>
    %115 = arith.addf %105, %114 : vector<16x512xf32>
    %c0_35 = arith.constant 0 : index
    %c0_36 = arith.constant 0 : index
    %116 = vector.load %arg8[%c0_35, %c0_36] : memref<16x1xf32, #tpu.memory_space<vmem>>, vector<16x1xf32>
    %117 = vector.broadcast %116 : vector<16x1xf32> to vector<16x512xf32>
    %118 = arith.addf %115, %117 : vector<16x512xf32>
    %cst_37 = arith.constant 0.000000e+00 : f32
    %119 = vector.broadcast %cst_37 : f32 to vector<16x512xf32>
    %120 = arith.maximumf %118, %119 : vector<16x512xf32>
    %cst_38 = arith.constant 0xFF800000 : f32
    %121 = arith.truncf %cst_38 : f32 to bf16
    %122 = vector.shape_cast %26 : vector<1x672xi1> to vector<1x672xi1>
    %123 = vector.broadcast %122 : vector<1x672xi1> to vector<8x672xi1>
    %124 = vector.broadcast %121 : bf16 to vector<8x672xbf16>
    %125 = arith.select %123, %5, %124 : vector<8x672xi1>, vector<8x672xbf16>
    %126 = vector.extract_strided_slice %125 {offsets = [0, 0], sizes = [8, 670], strides = [1, 1]} : vector<8x672xbf16> to vector<8x670xbf16>
    %127 = vector.extract_strided_slice %125 {offsets = [0, 1], sizes = [8, 670], strides = [1, 1]} : vector<8x672xbf16> to vector<8x670xbf16>
    %128 = arith.maximumf %126, %127 : vector<8x670xbf16>
    %129 = vector.extract_strided_slice %125 {offsets = [0, 2], sizes = [8, 670], strides = [1, 1]} : vector<8x672xbf16> to vector<8x670xbf16>
    %130 = arith.maximumf %128, %129 : vector<8x670xbf16>
    %131 = vector.extract_strided_slice %130 {offsets = [0, 33], sizes = [8, 512], strides = [1, 1]} : vector<8x670xbf16> to vector<8x512xbf16>
    %132 = vector.extract_strided_slice %130 {offsets = [0, 65], sizes = [8, 512], strides = [1, 1]} : vector<8x670xbf16> to vector<8x512xbf16>
    %133 = arith.maximumf %131, %132 : vector<8x512xbf16>
    %134 = vector.extract_strided_slice %130 {offsets = [0, 97], sizes = [8, 512], strides = [1, 1]} : vector<8x670xbf16> to vector<8x512xbf16>
    %135 = arith.maximumf %133, %134 : vector<8x512xbf16>
    %c0_39 = arith.constant 0 : index
    %c0_40 = arith.constant 0 : index
    %136 = vector.load %arg9[%c0_39, %c0_40] : memref<16x8xbf16, #tpu.memory_space<vmem>>, vector<16x8xbf16>
    %cst_41 = arith.constant dense<0.000000e+00> : vector<16x512xf32>
    %137 = tpu.matmul %136, %135, %cst_41 {dimension_numbers = #tpu.dot_dimension_numbers<[1], [0], [0], [1], [0, 0, 1, 1], [], []>} : vector<16x8xbf16>, vector<8x512xbf16>, vector<16x512xf32> -> vector<16x512xf32>
    %c0_42 = arith.constant 0 : index
    %c0_43 = arith.constant 0 : index
    %138 = vector.load %arg10[%c0_42, %c0_43] : memref<16x1xf32, #tpu.memory_space<vmem>>, vector<16x1xf32>
    %139 = vector.broadcast %138 : vector<16x1xf32> to vector<16x512xf32>
    %140 = arith.addf %137, %139 : vector<16x512xf32>
    %cst_44 = arith.constant 0.000000e+00 : f32
    %141 = vector.broadcast %cst_44 : f32 to vector<16x512xf32>
    %142 = arith.maximumf %140, %141 : vector<16x512xf32>
    %143 = arith.truncf %35 : vector<16x512xf32> to vector<16x512xbf16>
    %c0_45 = arith.constant 0 : index
    %c0_46 = arith.constant 0 : index
    %c0_47 = arith.constant 0 : index
    %144 = vector.load %arg11[%c0_45, %c0_46, %c0_47] : memref<1x64x512xbf16, #tpu.memory_space<vmem>>, vector<1x16x512xbf16>
    %145 = vector.shape_cast %144 : vector<1x16x512xbf16> to vector<16x512xbf16>
    %146 = vector.shape_cast %143 : vector<16x512xbf16> to vector<1x16x512xbf16>
    tpu.vector_store %arg11[%c0_45, %c0_46, %c0_47], %146 {strides = array<i32>} : memref<1x64x512xbf16, #tpu.memory_space<vmem>>, vector<1x16x512xbf16>,
    %147 = arith.truncf %58 : vector<16x512xf32> to vector<16x512xbf16>
    %c0_48 = arith.constant 0 : index
    %c16 = arith.constant 16 : index
    %c0_49 = arith.constant 0 : index
    %148 = vector.load %arg11[%c0_48, %c16, %c0_49] : memref<1x64x512xbf16, #tpu.memory_space<vmem>>, vector<1x16x512xbf16>
    %149 = vector.shape_cast %148 : vector<1x16x512xbf16> to vector<16x512xbf16>
    %150 = vector.shape_cast %147 : vector<16x512xbf16> to vector<1x16x512xbf16>
    tpu.vector_store %arg11[%c0_48, %c16, %c0_49], %150 {strides = array<i32>} : memref<1x64x512xbf16, #tpu.memory_space<vmem>>, vector<1x16x512xbf16>,
    %151 = arith.truncf %120 : vector<16x512xf32> to vector<16x512xbf16>
    %c0_50 = arith.constant 0 : index
    %c32 = arith.constant 32 : index
    %c0_51 = arith.constant 0 : index
    %152 = vector.load %arg11[%c0_50, %c32, %c0_51] : memref<1x64x512xbf16, #tpu.memory_space<vmem>>, vector<1x16x512xbf16>
    %153 = vector.shape_cast %152 : vector<1x16x512xbf16> to vector<16x512xbf16>
    %154 = vector.shape_cast %151 : vector<16x512xbf16> to vector<1x16x512xbf16>
    tpu.vector_store %arg11[%c0_50, %c32, %c0_51], %154 {strides = array<i32>} : memref<1x64x512xbf16, #tpu.memory_space<vmem>>, vector<1x16x512xbf16>,
    %155 = arith.truncf %142 : vector<16x512xf32> to vector<16x512xbf16>
    %c0_52 = arith.constant 0 : index
    %c48 = arith.constant 48 : index
    %c0_53 = arith.constant 0 : index
    %156 = vector.load %arg11[%c0_52, %c48, %c0_53] : memref<1x64x512xbf16, #tpu.memory_space<vmem>>, vector<1x16x512xbf16>
    %157 = vector.shape_cast %156 : vector<1x16x512xbf16> to vector<16x512xbf16>
    %158 = vector.shape_cast %155 : vector<16x512xbf16> to vector<1x16x512xbf16>
    tpu.vector_store %arg11[%c0_52, %c48, %c0_53], %158 {strides = array<i32>} : memref<1x64x512xbf16, #tpu.memory_space<vmem>>, vector<1x16x512xbf16>,
    return
  }
  func.func @transform_0(%arg0: i32, %arg1: i32) -> (i32, i32, i32) {
    %c0_i32 = arith.constant 0 : i32
    %c0_i32_0 = arith.constant 0 : i32
    %c0_i32_1 = arith.constant 0 : i32
    return %arg0, %c0_i32, %c0_i32_0 : i32, i32, i32
  }
  func.func @transform_1(%arg0: i32, %arg1: i32) -> (i32, i32) {
    %c0_i32 = arith.constant 0 : i32
    %c0_i32_0 = arith.constant 0 : i32
    %c0_i32_1 = arith.constant 0 : i32
    return %c0_i32, %c0_i32_0 : i32, i32
  }
  func.func @transform_2(%arg0: i32, %arg1: i32) -> (i32, i32) {
    %c0_i32 = arith.constant 0 : i32
    %c0_i32_0 = arith.constant 0 : i32
    %c0_i32_1 = arith.constant 0 : i32
    return %c0_i32, %c0_i32_0 : i32, i32
  }
  func.func @transform_3(%arg0: i32, %arg1: i32) -> (i32, i32) {
    %c0_i32 = arith.constant 0 : i32
    %c0_i32_0 = arith.constant 0 : i32
    %c0_i32_1 = arith.constant 0 : i32
    return %c0_i32, %c0_i32_0 : i32, i32
  }
  func.func @transform_4(%arg0: i32, %arg1: i32) -> (i32, i32) {
    %c0_i32 = arith.constant 0 : i32
    %c0_i32_0 = arith.constant 0 : i32
    %c0_i32_1 = arith.constant 0 : i32
    return %c0_i32, %c0_i32_0 : i32, i32
  }
  func.func @transform_5(%arg0: i32, %arg1: i32) -> (i32, i32, i32) {
    %c0_i32 = arith.constant 0 : i32
    %c0_i32_0 = arith.constant 0 : i32
    %c0_i32_1 = arith.constant 0 : i32
    %c0_i32_2 = arith.constant 0 : i32
    return %c0_i32, %c0_i32_0, %c0_i32_1 : i32, i32, i32
  }
  func.func @transform_6(%arg0: i32, %arg1: i32) -> (i32, i32) {
    %c0_i32 = arith.constant 0 : i32
    %c0_i32_0 = arith.constant 0 : i32
    %c0_i32_1 = arith.constant 0 : i32
    return %c0_i32, %c0_i32_0 : i32, i32
  }
  func.func @transform_7(%arg0: i32, %arg1: i32) -> (i32, i32) {
    %c0_i32 = arith.constant 0 : i32
    %c0_i32_0 = arith.constant 0 : i32
    %c0_i32_1 = arith.constant 0 : i32
    return %c0_i32, %c0_i32_0 : i32, i32
  }
  func.func @transform_8(%arg0: i32, %arg1: i32) -> (i32, i32) {
    %c0_i32 = arith.constant 0 : i32
    %c0_i32_0 = arith.constant 0 : i32
    %c0_i32_1 = arith.constant 0 : i32
    return %c0_i32, %c0_i32_0 : i32, i32
  }
  func.func @transform_9(%arg0: i32, %arg1: i32) -> (i32, i32, i32) {
    %c0_i32 = arith.constant 0 : i32
    %c0_i32_0 = arith.constant 0 : i32
    return %arg0, %c0_i32, %arg1 : i32, i32, i32
  }
}

</mosaic_0001>

<llo_original>
// kernel: inception_forward.1
$region0: #{inception_forward.1}
  #allocation0 [shape = 'u32[]', space=smem, size = 0x4, offset = 0x4, fixed_abs, tag = 'smem constant byte address 0x4 - core index']
  #allocation1 [shape = 'u32[144,128]{1,0:T(1,128)}', space=vmem, size = 0x12000, scoped, tag = 'internal scratch']
  %s0 = inlined_call_operand.vmem [shape: bf16[2,8,672], index: 0, kind: input, shape index: {}]
  %s1 = inlined_call_operand.vmem [shape: bf16[32,8], index: 1, kind: input, shape index: {}]
  %s2 = inlined_call_operand.vmem [shape: f32[32,1], index: 2, kind: input, shape index: {}]
  %s3 = inlined_call_operand.vmem [shape: bf16[16,72], index: 3, kind: input, shape index: {}]
  %s4 = inlined_call_operand.vmem [shape: f32[16,1], index: 4, kind: input, shape index: {}]
  %s5 = inlined_call_operand.vmem [shape: bf16[5,16,40], index: 5, kind: input, shape index: {}]
  %s6 = inlined_call_operand.vmem [shape: f32[16,1], index: 6, kind: input, shape index: {}]
  %s7 = inlined_call_operand.vmem [shape: bf16[16,8], index: 7, kind: input, shape index: {}]
  %s8 = inlined_call_operand.vmem [shape: f32[16,1], index: 8, kind: input, shape index: {}]
  %s9 = inlined_call_operand.vmem [shape: bf16[2,64,512], index: 9, kind: output, shape index: {}]
  %s10 = sld [smem:[#allocation0]]
  $region69: #{inception_forward.1} parent=0
    _
  %s12 = ssub.s32 1, %s10
  %s13 = scalar_select 0, %s12, %s10
  loop: start=0, step=1, limit=4
  $region2: #{inception_forward.1} parent=0 // loop_pre_header
    _
  $region3: #{inception_forward.1} parent=0 // loop_header
    %s15 = sphi 0, %s19
    %p16 = scmp.ge.s32.totalorder %s15, 4
    %s22 = sphi 0, %s34
    %s23 = sphi 0, %s30
    %s24 = sphi 0, %s22
    %s25 = sphi 0, %s23
    %s26 = sphi 0, %s24
    %s27 = sphi 0, %s25
    %s37 = sphi 0, %s39
    %s40 = sphi 0, %s37
    %s41 = sphi 0, %s40
    %s57 = sphi 0, %s41
    %s61 = sphi 0, %s61
    %s63 = sphi 0, %s61
    %s64 = sphi 0, %s63
    %s78 = sphi 0, %s64
    %s82 = sphi 0, %s82
    %s84 = sphi 0, %s82
    %s85 = sphi 0, %s84
    %s99 = sphi 0, %s85
    %s103 = sphi 0, %s103
    %s105 = sphi 0, %s103
    %s106 = sphi 0, %s105
    %s120 = sphi 0, %s106
    %s124 = sphi 0, %s124
    %s126 = sphi 0, %s124
    %s127 = sphi 0, %s126
    %s141 = sphi 0, %s127
    %s145 = sphi 0, %s145
    %s147 = sphi 0, %s145
    %s148 = sphi 0, %s147
    %s162 = sphi 0, %s148
    %s166 = sphi 0, %s166
    %s168 = sphi 0, %s166
    %s169 = sphi 0, %s168
    %s183 = sphi 0, %s169
    %s187 = sphi 0, %s187
    %s189 = sphi 0, %s187
    %s190 = sphi 0, %s189
    %s204 = sphi 0, %s190
    %s208 = sphi 0, %s208
    %s210 = sphi 0, %s208
    %s211 = sphi 0, %s210
    %s225 = sphi 0, %s211
    %s233 = sphi 0, %s235
    %s236 = sphi 0, %s233
    %s237 = sphi 0, %s236
    %s253 = sphi 0, %s237
  $region4: #{inception_forward.1} parent=0 // loop_header_branch
    %18 = sbr.rel (%p16) target = $region8
  $region5: #{inception_forward.1} parent=0 // loop_body
    %s20 = ssub.s32 %s15, 1
    %s21 = ssub.s32 %s15, 2
    %s28 = sadd.s32 1, %s23
    %p29 = scmp.ge.s32.totalorder %s28, 1
    %s30 = scalar_select %p29, 0, %s28
    %s31 = sadd.s32 1, %s22
    %s32 = scalar_select %p29, %s31, %s22
    %p33 = scmp.ge.s32.totalorder %s32, 2
    %s34 = scalar_select %p33, 0, %s32
    %s35 = ssub.s32 %s22, %s34
    %p36 = scmp.eq.s32.totalorder %s35, 0
    %s38 = sadd.s32 %s37, 1
    %s39 = scalar_select %p36, %s37, %s38
    %p42 = pneg %p36
    %p43 = scmp.eq.s32.totalorder %s15, 1
    %p44 = por %p42, %p43
    %p45 = scmp.ne.s32.totalorder %s37, %s40
    %p46 = scmp.eq.s32.totalorder %s15, 0
    %p47 = por %p45, %p46
    %p48 = scmp.ne.s32.totalorder %s37, %s40
    %p49 = scmp.eq.s32.totalorder %s20, 1
    %p50 = por %p48, %p49
    %p51 = scmp.ne.s32.totalorder %s40, %s41
    %p52 = scmp.eq.s32.totalorder %s20, 0
    %p53 = por %p51, %p52
    %p54 = scmp.ne.s32.totalorder %s40, %s41
    %p55 = scmp.eq.s32.totalorder %s21, 1
    %p56 = por %p54, %p55
    %p58 = scmp.ne.s32.totalorder %s41, %s57
    %p59 = scmp.eq.s32.totalorder %s21, 0
    %p60 = por %p58, %p59
    %s62 = sadd.s32 %s61, 1
    %p65 = scmp.eq.s32.totalorder %s15, 1
    %p66 = scmp.ne.s32.totalorder %s61, %s63
    %p67 = scmp.eq.s32.totalorder %s15, 0
    %p68 = por %p66, %p67
    %p69 = scmp.ne.s32.totalorder %s61, %s63
    %p70 = scmp.eq.s32.totalorder %s20, 1
    %p71 = por %p69, %p70
    %p72 = scmp.ne.s32.totalorder %s63, %s64
    %p73 = scmp.eq.s32.totalorder %s20, 0
    %p74 = por %p72, %p73
    %p75 = scmp.ne.s32.totalorder %s63, %s64
    %p76 = scmp.eq.s32.totalorder %s21, 1
    %p77 = por %p75, %p76
    %p79 = scmp.ne.s32.totalorder %s64, %s78
    %p80 = scmp.eq.s32.totalorder %s21, 0
    %p81 = por %p79, %p80
    %s83 = sadd.s32 %s82, 1
    %p86 = scmp.eq.s32.totalorder %s15, 1
    %p87 = scmp.ne.s32.totalorder %s82, %s84
    %p88 = scmp.eq.s32.totalorder %s15, 0
    %p89 = por %p87, %p88
    %p90 = scmp.ne.s32.totalorder %s82, %s84
    %p91 = scmp.eq.s32.totalorder %s20, 1
    %p92 = por %p90, %p91
    %p93 = scmp.ne.s32.totalorder %s84, %s85
    %p94 = scmp.eq.s32.totalorder %s20, 0
    %p95 = por %p93, %p94
    %p96 = scmp.ne.s32.totalorder %s84, %s85
    %p97 = scmp.eq.s32.totalorder %s21, 1
    %p98 = por %p96, %p97
    %p100 = scmp.ne.s32.totalorder %s85, %s99
    %p101 = scmp.eq.s32.totalorder %s21, 0
    %p102 = por %p100, %p101
    %s104 = sadd.s32 %s103, 1
    %p107 = scmp.eq.s32.totalorder %s15, 1
    %p108 = scmp.ne.s32.totalorder %s103, %s105
    %p109 = scmp.eq.s32.totalorder %s15, 0
    %p110 = por %p108, %p109
    %p111 = scmp.ne.s32.totalorder %s103, %s105
    %p112 = scmp.eq.s32.totalorder %s20, 1
    %p113 = por %p111, %p112
    %p114 = scmp.ne.s32.totalorder %s105, %s106
    %p115 = scmp.eq.s32.totalorder %s20, 0
    %p116 = por %p114, %p115
    %p117 = scmp.ne.s32.totalorder %s105, %s106
    %p118 = scmp.eq.s32.totalorder %s21, 1
    %p119 = por %p117, %p118
    %p121 = scmp.ne.s32.totalorder %s106, %s120
    %p122 = scmp.eq.s32.totalorder %s21, 0
    %p123 = por %p121, %p122
    %s125 = sadd.s32 %s124, 1
    %p128 = scmp.eq.s32.totalorder %s15, 1
    %p129 = scmp.ne.s32.totalorder %s124, %s126
    %p130 = scmp.eq.s32.totalorder %s15, 0
    %p131 = por %p129, %p130
    %p132 = scmp.ne.s32.totalorder %s124, %s126
    %p133 = scmp.eq.s32.totalorder %s20, 1
    %p134 = por %p132, %p133
    %p135 = scmp.ne.s32.totalorder %s126, %s127
    %p136 = scmp.eq.s32.totalorder %s20, 0
    %p137 = por %p135, %p136
    %p138 = scmp.ne.s32.totalorder %s126, %s127
    %p139 = scmp.eq.s32.totalorder %s21, 1
    %p140 = por %p138, %p139
    %p142 = scmp.ne.s32.totalorder %s127, %s141
    %p143 = scmp.eq.s32.totalorder %s21, 0
    %p144 = por %p142, %p143
    %s146 = sadd.s32 %s145, 1
    %p149 = scmp.eq.s32.totalorder %s15, 1
    %p150 = scmp.ne.s32.totalorder %s145, %s147
    %p151 = scmp.eq.s32.totalorder %s15, 0
    %p152 = por %p150, %p151
    %p153 = scmp.ne.s32.totalorder %s145, %s147
    %p154 = scmp.eq.s32.totalorder %s20, 1
    %p155 = por %p153, %p154
    %p156 = scmp.ne.s32.totalorder %s147, %s148
    %p157 = scmp.eq.s32.totalorder %s20, 0
    %p158 = por %p156, %p157
    %p159 = scmp.ne.s32.totalorder %s147, %s148
    %p160 = scmp.eq.s32.totalorder %s21, 1
    %p161 = por %p159, %p160
    %p163 = scmp.ne.s32.totalorder %s148, %s162
    %p164 = scmp.eq.s32.totalorder %s21, 0
    %p165 = por %p163, %p164
    %s167 = sadd.s32 %s166, 1
    %p170 = scmp.eq.s32.totalorder %s15, 1
    %p171 = scmp.ne.s32.totalorder %s166, %s168
    %p172 = scmp.eq.s32.totalorder %s15, 0
    %p173 = por %p171, %p172
    %p174 = scmp.ne.s32.totalorder %s166, %s168
    %p175 = scmp.eq.s32.totalorder %s20, 1
    %p176 = por %p174, %p175
    %p177 = scmp.ne.s32.totalorder %s168, %s169
    %p178 = scmp.eq.s32.totalorder %s20, 0
    %p179 = por %p177, %p178
    %p180 = scmp.ne.s32.totalorder %s168, %s169
    %p181 = scmp.eq.s32.totalorder %s21, 1
    %p182 = por %p180, %p181
    %p184 = scmp.ne.s32.totalorder %s169, %s183
    %p185 = scmp.eq.s32.totalorder %s21, 0
    %p186 = por %p184, %p185
    %s188 = sadd.s32 %s187, 1
    %p191 = scmp.eq.s32.totalorder %s15, 1
    %p192 = scmp.ne.s32.totalorder %s187, %s189
    %p193 = scmp.eq.s32.totalorder %s15, 0
    %p194 = por %p192, %p193
    %p195 = scmp.ne.s32.totalorder %s187, %s189
    %p196 = scmp.eq.s32.totalorder %s20, 1
    %p197 = por %p195, %p196
    %p198 = scmp.ne.s32.totalorder %s189, %s190
    %p199 = scmp.eq.s32.totalorder %s20, 0
    %p200 = por %p198, %p199
    %p201 = scmp.ne.s32.totalorder %s189, %s190
    %p202 = scmp.eq.s32.totalorder %s21, 1
    %p203 = por %p201, %p202
    %p205 = scmp.ne.s32.totalorder %s190, %s204
    %p206 = scmp.eq.s32.totalorder %s21, 0
    %p207 = por %p205, %p206
    %s209 = sadd.s32 %s208, 1
    %p212 = scmp.eq.s32.totalorder %s15, 1
    %p213 = scmp.ne.s32.totalorder %s208, %s210
    %p214 = scmp.eq.s32.totalorder %s15, 0
    %p215 = por %p213, %p214
    %p216 = scmp.ne.s32.totalorder %s208, %s210
    %p217 = scmp.eq.s32.totalorder %s20, 1
    %p218 = por %p216, %p217
    %p219 = scmp.ne.s32.totalorder %s210, %s211
    %p220 = scmp.eq.s32.totalorder %s20, 0
    %p221 = por %p219, %p220
    %p222 = scmp.ne.s32.totalorder %s210, %s211
    %p223 = scmp.eq.s32.totalorder %s21, 1
    %p224 = por %p222, %p223
    %p226 = scmp.ne.s32.totalorder %s211, %s225
    %p227 = scmp.eq.s32.totalorder %s21, 0
    %p228 = por %p226, %p227
    %s229 = ssub.s32 %s22, %s34
    %s230 = ssub.s32 %s23, %s30
    %s231 = sor.u32 %s229, %s230
    %p232 = scmp.eq.s32.totalorder %s231, 0
    %s234 = sadd.s32 %s233, 1
    %s235 = scalar_select %p232, %s233, %s234
    %p238 = pneg %p232
    %p239 = scmp.eq.s32.totalorder %s15, 1
    %p240 = por %p238, %p239
    %p241 = scmp.ne.s32.totalorder %s233, %s236
    %p242 = scmp.eq.s32.totalorder %s15, 0
    %p243 = por %p241, %p242
    %p244 = scmp.ne.s32.totalorder %s233, %s236
    %p245 = scmp.eq.s32.totalorder %s20, 1
    %p246 = por %p244, %p245
    %p247 = scmp.ne.s32.totalorder %s236, %s237
    %p248 = scmp.eq.s32.totalorder %s20, 0
    %p249 = por %p247, %p248
    %p250 = scmp.ne.s32.totalorder %s236, %s237
    %p251 = scmp.eq.s32.totalorder %s21, 1
    %p252 = por %p250, %p251
    %p254 = scmp.ne.s32.totalorder %s237, %s253
    %p255 = scmp.eq.s32.totalorder %s21, 0
    %p256 = por %p254, %p255
    %p257 = scmp.le.s32.totalorder 1, %s15
    %p258 = scmp.lt.s32.totalorder %s15, 3
    %p259 = pnand %p257, %p258
    %p260 = pneg %p259
    // Predicated region
    $region9: #{inception_forward.1} parent=5 // pred_check
      _
    $region10: #{inception_forward.1} parent=5 // pred_check_branch
      %262 = sbr.rel (%p259) target = $region12
    $region11: #{inception_forward.1} parent=5 // pred_region
      %s263 = ssub.s32 %s15, 1
      // Predicated region
      $region13: #{inception_forward.1} parent=11 // pred_check
        %p264 = pneg %p74
      $region14: #{inception_forward.1} parent=11 // pred_check_branch
        %266 = sbr.rel (%p264) target = $region16
      $region15: #{inception_forward.1} parent=11 // pred_region
        _
      $region16: #{inception_forward.1} parent=11 // pred_fallthru
        _
      // Predicated region
      $region17: #{inception_forward.1} parent=11 // pred_check
        %p267 = pneg %p95
      $region18: #{inception_forward.1} parent=11 // pred_check_branch
        %269 = sbr.rel (%p267) target = $region20
      $region19: #{inception_forward.1} parent=11 // pred_region
        _
      $region20: #{inception_forward.1} parent=11 // pred_fallthru
        _
      // Predicated region
      $region21: #{inception_forward.1} parent=11 // pred_check
        %p270 = pneg %p116
      $region22: #{inception_forward.1} parent=11 // pred_check_branch
        %272 = sbr.rel (%p270) target = $region24
      $region23: #{inception_forward.1} parent=11 // pred_region
        _
      $region24: #{inception_forward.1} parent=11 // pred_fallthru
        _
      // Predicated region
      $region25: #{inception_forward.1} parent=11 // pred_check
        %p273 = pneg %p137
      $region26: #{inception_forward.1} parent=11 // pred_check_branch
        %275 = sbr.rel (%p273) target = $region28
      $region27: #{inception_forward.1} parent=11 // pred_region
        _
      $region28: #{inception_forward.1} parent=11 // pred_fallthru
        _
      // Predicated region
      $region29: #{inception_forward.1} parent=11 // pred_check
        %p276 = pneg %p158
      $region30: #{inception_forward.1} parent=11 // pred_check_branch
        %278 = sbr.rel (%p276) target = $region32
      $region31: #{inception_forward.1} parent=11 // pred_region
        _
      $region32: #{inception_forward.1} parent=11 // pred_fallthru
        _
      // Predicated region
      $region33: #{inception_forward.1} parent=11 // pred_check
        %p279 = pneg %p179
      $region34: #{inception_forward.1} parent=11 // pred_check_branch
        %281 = sbr.rel (%p279) target = $region36
      $region35: #{inception_forward.1} parent=11 // pred_region
        _
      $region36: #{inception_forward.1} parent=11 // pred_fallthru
        _
      // Predicated region
      $region37: #{inception_forward.1} parent=11 // pred_check
        %p282 = pneg %p200
      $region38: #{inception_forward.1} parent=11 // pred_check_branch
        %284 = sbr.rel (%p282) target = $region40
      $region39: #{inception_forward.1} parent=11 // pred_region
        _
      $region40: #{inception_forward.1} parent=11 // pred_fallthru
        _
      // Predicated region
      $region41: #{inception_forward.1} parent=11 // pred_check
        %p285 = pneg %p221
      $region42: #{inception_forward.1} parent=11 // pred_check_branch
        %287 = sbr.rel (%p285) target = $region44
      $region43: #{inception_forward.1} parent=11 // pred_region
        _
      $region44: #{inception_forward.1} parent=11 // pred_fallthru
        _
    $region12: #{inception_forward.1} parent=5 // pred_fallthru
      _
    %p288 = scmp.lt.s32.totalorder %s15, 2
    // Predicated region
    $region45: #{inception_forward.1} parent=5 // pred_check
      %p289 = pneg %p288
    $region46: #{inception_forward.1} parent=5 // pred_check_branch
      %291 = sbr.rel (%p289) target = $region48
    $region47: #{inception_forward.1} parent=5 // pred_region
      // Predicated region
      $region49: #{inception_forward.1} parent=47 // pred_check
        %p292 = pneg %p47
      $region50: #{inception_forward.1} parent=47 // pred_check_branch
        %294 = sbr.rel (%p292) target = $region52
      $region51: #{inception_forward.1} parent=47 // pred_region
        %p295 = scmp.lt.s32.totalorder %s22, 1
        %s296 = scalar_select %p295, %s22, 1
        %s297 = smul.addr %s296, 6
        %s298 = smul.addr %s297, 4
        %s299 = scalar_lea.vmem %s0, %s298
      $region52: #{inception_forward.1} parent=47 // pred_fallthru
        _
    $region48: #{inception_forward.1} parent=5 // pred_fallthru
      _
    %p300 = scmp.le.s32.totalorder 1, %s15
    %p301 = scmp.lt.s32.totalorder %s15, 3
    %p302 = pnand %p300, %p301
    %p303 = pneg %p302
    // Predicated region
    $region53: #{inception_forward.1} parent=5 // pred_check
      _
    $region54: #{inception_forward.1} parent=5 // pred_check_branch
      %305 = sbr.rel (%p302) target = $region56
    $region55: #{inception_forward.1} parent=5 // pred_region
      %s306 = ssub.s32 %s15, 1
      %p307 = scmp.lt.s32.totalorder %s24, 1
      %s308 = scalar_select %p307, %s24, 1
      %s309 = smul.addr %s308, 6
      %s310 = smul.addr %s309, 4
      %s311 = scalar_lea.vmem %s0, %s310
      %p312 = pneg %p53
      %p313 = pneg %p50
      %p314 = pneg %p74
      %p315 = pneg %p71
      %p316 = pneg %p95
      %p317 = pneg %p92
      %p318 = pneg %p116
      %p319 = pneg %p113
      %p320 = pneg %p137
      %p321 = pneg %p134
      %p322 = pneg %p158
      %p323 = pneg %p155
      %p324 = pneg %p179
      %p325 = pneg %p176
      %p326 = pneg %p200
      %p327 = pneg %p197
      %p328 = pneg %p221
      %p329 = pneg %p218
      %p330 = pneg %p249
      %p331 = pneg %p246
      %s332 = smul.u32 4, %s25
      %p333 = scmp.lt.s32.totalorder %s24, 1
      %s334 = scalar_select %p333, %s24, 1
      %p335 = scmp.lt.s32.totalorder %s332, 3
      %s336 = scalar_select %p335, %s332, 3
      %s337 = smul.addr %s334, 32
      %s338 = sadd.s32 %s336, %s337
      %s339 = smul.addr %s338, 4
      %s340 = scalar_lea.vmem %s9, %s339
      %p341 = scmp.lt.s32.totalorder %s24, 1
      %s342 = scalar_select %p341, %s24, 1
      %s343 = smul.addr %s342, 6
      %s344 = smul.addr %s343, 4
      %s345 = scalar_lea.vmem %s0, %s344
      %s346 = smul.u32 4, %s25
      %p347 = scmp.lt.s32.totalorder %s24, 1
      %s348 = scalar_select %p347, %s24, 1
      %p349 = scmp.lt.s32.totalorder %s346, 3
      %s350 = scalar_select %p349, %s346, 3
      %s351 = smul.addr %s348, 32
      %s352 = sadd.s32 %s350, %s351
      %s353 = smul.addr %s352, 4
      %s354 = scalar_lea.vmem %s9, %s353
      %s355 = smul.u32 4, %s25
      %s358 = smul.u32 %s25, 16
      %s359 = smul.u32 %s25, 512
      %s360 = sshra.s32 %s359, 7
      %s361 = sand.u32 %s359, 127
      %s362 = smul.addr %s360, 4
      %s363 = scalar_lea.vmem %s345, %s362
      %v364 = vld [vmem:[%s363] sm:$0xff]
      %v365 = vld [vmem:[%s363 + $0x8] sm:$0xff]
      %v366 = vld [vmem:[%s363 + $0x10] sm:$0xff]
      %v367 = vlaneseq
      %v368 = vand.u32 %v367, 127
      %v369 = vadd.s32 %v368, 128
      %v370 = vadd.s32 %v368, 256
      %v371 = vadd.s32 %v368, 384
      %v372 = vadd.s32 %v368, 512
      %v373 = vadd.s32 %v368, 640
      %s374 = ssub.s32 %s358, 2
      %v375 = vshra.s32 %v368, 5
      %v376 = vshra.s32 %v369, 5
      %v377 = vshra.s32 %v370, 5
      %v378 = vshra.s32 %v371, 5
      %v379 = vshra.s32 %v372, 5
      %v380 = vshra.s32 %v373, 5
      %v381 = vstv %s374
      %v382 = vadd.s32 %v381, %v375
      %v383 = vadd.s32 %v381, %v376
      %v384 = vadd.s32 %v381, %v377
      %v385 = vadd.s32 %v381, %v378
      %v386 = vadd.s32 %v381, %v379
      %v387 = vadd.s32 %v381, %v380
      %v388 = vand.u32 %v368, 31
      %v389 = vand.u32 %v369, 31
      %v390 = vand.u32 %v370, 31
      %v391 = vand.u32 %v371, 31
      %v392 = vand.u32 %v372, 31
      %v393 = vand.u32 %v373, 31
      %v394 = vsub.s32 %v388, 2
      %v395 = vsub.s32 %v389, 2
      %v396 = vsub.s32 %v390, 2
      %v397 = vsub.s32 %v391, 2
      %v398 = vsub.s32 %v392, 2
      %v399 = vsub.s32 %v393, 2
      %vm400 = vcmp.ge.s32.totalorder %v382, 0
      %vm401 = vcmp.ge.s32.totalorder %v383, 0
      %vm402 = vcmp.ge.s32.totalorder %v384, 0
      %vm403 = vcmp.ge.s32.totalorder %v385, 0
      %vm404 = vcmp.ge.s32.totalorder %v386, 0
      %vm405 = vcmp.ge.s32.totalorder %v387, 0
      %vm406 = vcmp.lt.s32.totalorder %v382, 16
      %vm407 = vcmp.lt.s32.totalorder %v383, 16
      %vm408 = vcmp.lt.s32.totalorder %v384, 16
      %vm409 = vcmp.lt.s32.totalorder %v385, 16
      %vm410 = vcmp.lt.s32.totalorder %v386, 16
      %vm411 = vcmp.lt.s32.totalorder %v387, 16
      %vm412 = vmand %vm400, %vm406
      %vm413 = vmand %vm401, %vm407
      %vm414 = vmand %vm402, %vm408
      %vm415 = vmand %vm403, %vm409
      %vm416 = vmand %vm404, %vm410
      %vm417 = vmand %vm405, %vm411
      %vm418 = vcmp.ge.s32.totalorder %v394, 0
      %vm419 = vcmp.ge.s32.totalorder %v395, 0
      %vm420 = vcmp.ge.s32.totalorder %v396, 0
      %vm421 = vcmp.ge.s32.totalorder %v397, 0
      %vm422 = vcmp.ge.s32.totalorder %v398, 0
      %vm423 = vcmp.ge.s32.totalorder %v399, 0
      %vm424 = vmand %vm412, %vm418
      %vm425 = vmand %vm413, %vm419
      %vm426 = vmand %vm414, %vm420
      %vm427 = vmand %vm415, %vm421
      %vm428 = vmand %vm416, %vm422
      %vm429 = vmand %vm417, %vm423
      %vm430 = vcmp.lt.s32.totalorder %v394, 16
      %vm431 = vcmp.lt.s32.totalorder %v395, 16
      %vm432 = vcmp.lt.s32.totalorder %v396, 16
      %vm433 = vcmp.lt.s32.totalorder %v397, 16
      %vm434 = vcmp.lt.s32.totalorder %v398, 16
      %vm435 = vcmp.lt.s32.totalorder %v399, 16
      %vm436 = vmand %vm424, %vm430
      %vm437 = vmand %vm425, %vm431
      %vm438 = vmand %vm426, %vm432
      %vm439 = vmand %vm427, %vm433
      %vm440 = vmand %vm428, %vm434
      %vm441 = vmand %vm429, %vm435
      %v442 = vld [vmem:[%s1] sm:$0xf]
      %v443 = vld [vmem:[%s1 + $0x4] sm:$0xf]
      %v444 = vld [vmem:[%s1 + $0x8] sm:$0xf]
      %v445 = vld [vmem:[%s1 + $0xc] sm:$0xf]
      %v446 = vld [vmem:[%s2] sm:$0xff]
      %v447 = vld [vmem:[%s2 + $0x8] sm:$0xff]
      %v448 = vld [vmem:[%s2 + $0x10] sm:$0xff]
      %v449 = vld [vmem:[%s2 + $0x18] sm:$0xff]
      %451 = vset.pattern.permute.xlu0 0
      %452 = vperm.xlu0 %451, %v446
      %v453 = vpop.permute.xlu0 %452
      %456 = vset.pattern.permute.xlu0 0
      %457 = vperm.xlu0 %456, %v447
      %v458 = vpop.permute.xlu0 %457
      %461 = vset.pattern.permute.xlu0 0
      %462 = vperm.xlu0 %461, %v448
      %v463 = vpop.permute.xlu0 %462
      %466 = vset.pattern.permute.xlu0 0
      %467 = vperm.xlu0 %466, %v449
      %v468 = vpop.permute.xlu0 %467
      %v474 = vunpack.c.l.b16 %v442
      %v475 = vunpack.c.l.b16 %v443
      %v476 = vunpack.c.l.b16 %v444
      %v477 = vunpack.c.l.b16 %v445
      %v478 = vpack.c.b16 %v475, %v474
      %v479 = vpack.c.b16 %v477, %v476
      %v483 = vunpack.c.l.b16 %v364
      %v484 = vunpack.c.h.b16 %v364
      %v485 = vunpack.c.l.b16 %v365
      %v486 = vunpack.c.h.b16 %v365
      %v487 = vunpack.c.l.b16 %v366
      %v488 = vunpack.c.h.b16 %v366
      %v489 = vpack.c.b16 %v483, %v483
      %v490 = vpack.c.b16 %v484, %v484
      %v491 = vpack.c.b16 %v485, %v485
      %v492 = vpack.c.b16 %v486, %v486
      %v493 = vpack.c.b16 %v487, %v487
      %v494 = vpack.c.b16 %v488, %v488
      %vm495 = vcmask 64512
      %v497 = vsel %vm495, %v478, 0
      %v500 = vsel %vm495, %v479, 0
      %vm502 = vcmask 1043456
      %v504 = vsel %vm502, %v489, 0
      %v507 = vsel %vm502, %v490, 0
      %v510 = vsel %vm502, %v491, 0
      %v513 = vsel %vm502, %v492, 0
      %v516 = vsel %vm502, %v493, 0
      %v519 = vsel %vm502, %v494, 0
      %521 = vmatprep.subr.bf16.mxu0 0
      %522 = vmatpush1.bf16.msra.mxu0 0
      %523 = vmatprep.subr.bf16.mxu0 0
      %524 = vmatpush1.bf16.msra.mxu0 0
      %525 = vmatprep.subr.bf16.mxu0 0
      %526 = vmatpush1.bf16.msra.mxu0 0
      %527 = vmatprep.subr.bf16.mxu0 0
      %528 = vmatpush1.bf16.msra.mxu0 0
      %529 = vmatprep.subr.bf16.mxu0 0
      %530 = vmatpush1.bf16.msra.mxu0 0
      %531 = vmatprep.subr.bf16.mxu0 0
      %532 = vmatpush1.bf16.msra.mxu0 0
      %533 = vmatprep.subr.bf16.mxu0 0
      %534 = vmatpush1.bf16.msra.mxu0 0
      %535 = vmatprep.subr.bf16.mxu0 %v507
      %536 = vmatpush1.bf16.msra.mxu0 %v504
      %537 = vmatprep.subr.bf16.mxu0 0
      %538 = vmatpush2.bf16.msra.mxu0 0
      %539 = vmatprep.subr.bf16.mxu0 0
      %540 = vmatpush2.bf16.msra.mxu0 0
      %541 = vmatprep.subr.bf16.mxu0 0
      %542 = vmatpush2.bf16.msra.mxu0 0
      %543 = vmatprep.subr.bf16.mxu0 0
      %544 = vmatpush2.bf16.msra.mxu0 0
      %545 = vmatprep.subr.bf16.mxu0 0
      %546 = vmatpush2.bf16.msra.mxu0 0
      %547 = vmatprep.subr.bf16.mxu0 0
      %548 = vmatpush2.bf16.msra.mxu0 0
      %549 = vmatprep.subr.bf16.mxu0 0
      %550 = vmatpush2.bf16.msra.mxu0 0
      %551 = vmatprep.subr.bf16.mxu0 0
      %552 = vmatpush2.bf16.msra.mxu0 0
      %553 = vmatprep.mubr.bf16.mxu0 0
      %554 = vmatmul.mubr.bf16.gmra.mxu0 %v497
      %v555 = vpop.f32.mrf.mxu0
      %v556 = vadd.f32 %v453, %v555
      %v557 = vpop.f32.mrf.mxu0
      %v558 = vadd.f32 %v453, %v557
      %v559 = vpop.f32.mrf.mxu0
      %v560 = vadd.f32 %v458, %v559
      %v561 = vpop.f32.mrf.mxu0
      %v562 = vadd.f32 %v458, %v561
      %563 = vmatprep.mubr.bf16.mxu0 0
      %564 = vmatmul.mubr.bf16.gmra.mxu0 %v500
      %v565 = vpop.f32.mrf.mxu0
      %v566 = vadd.f32 %v463, %v565
      %v567 = vpop.f32.mrf.mxu0
      %v568 = vadd.f32 %v463, %v567
      %v569 = vpop.f32.mrf.mxu0
      %v570 = vadd.f32 %v468, %v569
      %v571 = vpop.f32.mrf.mxu0
      %v572 = vadd.f32 %v468, %v571
      %573 = vdwg.mxu0
      %574 = vmatprep.subr.bf16.mxu0 0
      %575 = vmatpush1.bf16.msra.mxu0 0
      %576 = vmatprep.subr.bf16.mxu0 0
      %577 = vmatpush1.bf16.msra.mxu0 0
      %578 = vmatprep.subr.bf16.mxu0 0
      %579 = vmatpush1.bf16.msra.mxu0 0
      %580 = vmatprep.subr.bf16.mxu0 0
      %581 = vmatpush1.bf16.msra.mxu0 0
      %582 = vmatprep.subr.bf16.mxu0 0
      %583 = vmatpush1.bf16.msra.mxu0 0
      %584 = vmatprep.subr.bf16.mxu0 0
      %585 = vmatpush1.bf16.msra.mxu0 0
      %586 = vmatprep.subr.bf16.mxu0 0
      %587 = vmatpush1.bf16.msra.mxu0 0
      %588 = vmatprep.subr.bf16.mxu0 %v513
      %589 = vmatpush1.bf16.msra.mxu0 %v510
      %590 = vmatprep.subr.bf16.mxu0 0
      %591 = vmatpush2.bf16.msra.mxu0 0
      %592 = vmatprep.subr.bf16.mxu0 0
      %593 = vmatpush2.bf16.msra.mxu0 0
      %594 = vmatprep.subr.bf16.mxu0 0
      %595 = vmatpush2.bf16.msra.mxu0 0
      %596 = vmatprep.subr.bf16.mxu0 0
      %597 = vmatpush2.bf16.msra.mxu0 0
      %598 = vmatprep.subr.bf16.mxu0 0
      %599 = vmatpush2.bf16.msra.mxu0 0
      %600 = vmatprep.subr.bf16.mxu0 0
      %601 = vmatpush2.bf16.msra.mxu0 0
      %602 = vmatprep.subr.bf16.mxu0 0
      %603 = vmatpush2.bf16.msra.mxu0 0
      %604 = vmatprep.subr.bf16.mxu0 0
      %605 = vmatpush2.bf16.msra.mxu0 0
      %606 = vmatprep.mubr.bf16.mxu0 0
      %607 = vmatmul.mubr.bf16.gmra.mxu0 %v497
      %v608 = vpop.f32.mrf.mxu0
      %v609 = vadd.f32 %v453, %v608
      %v610 = vpop.f32.mrf.mxu0
      %v611 = vadd.f32 %v453, %v610
      %v612 = vpop.f32.mrf.mxu0
      %v613 = vadd.f32 %v458, %v612
      %v614 = vpop.f32.mrf.mxu0
      %v615 = vadd.f32 %v458, %v614
      %616 = vmatprep.mubr.bf16.mxu0 0
      %617 = vmatmul.mubr.bf16.gmra.mxu0 %v500
      %v618 = vpop.f32.mrf.mxu0
      %v619 = vadd.f32 %v463, %v618
      %v620 = vpop.f32.mrf.mxu0
      %v621 = vadd.f32 %v463, %v620
      %v622 = vpop.f32.mrf.mxu0
      %v623 = vadd.f32 %v468, %v622
      %v624 = vpop.f32.mrf.mxu0
      %v625 = vadd.f32 %v468, %v624
      %626 = vdwg.mxu0
      %627 = vmatprep.subr.bf16.mxu0 0
      %628 = vmatpush1.bf16.msra.mxu0 0
      %629 = vmatprep.subr.bf16.mxu0 0
      %630 = vmatpush1.bf16.msra.mxu0 0
      %631 = vmatprep.subr.bf16.mxu0 0
      %632 = vmatpush1.bf16.msra.mxu0 0
      %633 = vmatprep.subr.bf16.mxu0 0
      %634 = vmatpush1.bf16.msra.mxu0 0
      %635 = vmatprep.subr.bf16.mxu0 0
      %636 = vmatpush1.bf16.msra.mxu0 0
      %637 = vmatprep.subr.bf16.mxu0 0
      %638 = vmatpush1.bf16.msra.mxu0 0
      %639 = vmatprep.subr.bf16.mxu0 0
      %640 = vmatpush1.bf16.msra.mxu0 0
      %641 = vmatprep.subr.bf16.mxu0 %v519
      %642 = vmatpush1.bf16.msra.mxu0 %v516
      %643 = vmatprep.subr.bf16.mxu0 0
      %644 = vmatpush2.bf16.msra.mxu0 0
      %645 = vmatprep.subr.bf16.mxu0 0
      %646 = vmatpush2.bf16.msra.mxu0 0
      %647 = vmatprep.subr.bf16.mxu0 0
      %648 = vmatpush2.bf16.msra.mxu0 0
      %649 = vmatprep.subr.bf16.mxu0 0
      %650 = vmatpush2.bf16.msra.mxu0 0
      %651 = vmatprep.subr.bf16.mxu0 0
      %652 = vmatpush2.bf16.msra.mxu0 0
      %653 = vmatprep.subr.bf16.mxu0 0
      %654 = vmatpush2.bf16.msra.mxu0 0
      %655 = vmatprep.subr.bf16.mxu0 0
      %656 = vmatpush2.bf16.msra.mxu0 0
      %657 = vmatprep.subr.bf16.mxu0 0
      %658 = vmatpush2.bf16.msra.mxu0 0
      %659 = vmatprep.mubr.bf16.mxu0 0
      %660 = vmatmul.mubr.bf16.gmra.mxu0 %v497
      %v661 = vpop.f32.mrf.mxu0
      %v662 = vadd.f32 %v453, %v661
      %v663 = vpop.f32.mrf.mxu0
      %v664 = vpop.f32.mrf.mxu0
      %v665 = vadd.f32 %v458, %v664
      %v666 = vpop.f32.mrf.mxu0
      %667 = vmatprep.mubr.bf16.mxu0 0
      %668 = vmatmul.mubr.bf16.gmra.mxu0 %v500
      %v669 = vpop.f32.mrf.mxu0
      %v670 = vadd.f32 %v463, %v669
      %v671 = vpop.f32.mrf.mxu0
      %v672 = vpop.f32.mrf.mxu0
      %v673 = vadd.f32 %v468, %v672
      %v674 = vpop.f32.mrf.mxu0
      %v675 = vadd.f32 %v468, %v674
      %676 = vdwg.mxu0
      %v677 = vmax.f32 %v556, 0.0
      %v678 = vmax.f32 %v558, 0.0
      %v679 = vmax.f32 %v609, 0.0
      %v680 = vmax.f32 %v611, 0.0
      %v681 = vmax.f32 %v662, 0.0
      %v682 = vmax.f32 %v560, 0.0
      %v683 = vmax.f32 %v562, 0.0
      %v684 = vmax.f32 %v613, 0.0
      %v685 = vmax.f32 %v615, 0.0
      %v686 = vmax.f32 %v665, 0.0
      %v687 = vmax.f32 %v566, 0.0
      %v688 = vmax.f32 %v568, 0.0
      %v689 = vmax.f32 %v619, 0.0
      %v690 = vmax.f32 %v621, 0.0
      %v691 = vmax.f32 %v670, 0.0
      %v692 = vmax.f32 %v570, 0.0
      %v693 = vmax.f32 %v572, 0.0
      %v694 = vmax.f32 %v623, 0.0
      %v695 = vmax.f32 %v625, 0.0
      %v696 = vmax.f32 %v673, 0.0
      %v697 = vmax.f32 %v675, 0.0
      %v698 = vsel %vm436, 1, 0
      %v699 = vsel %vm437, 1, 0
      %v700 = vsel %vm438, 1, 0
      %v701 = vsel %vm439, 1, 0
      %v702 = vsel %vm440, 1, 0
      %v703 = vsel %vm441, 1, 0
      %vm704 = vcmp.eq.s32.totalorder %v698, 1
      %vm705 = vcmp.eq.s32.totalorder %v699, 1
      %vm706 = vcmp.eq.s32.totalorder %v700, 1
      %vm707 = vcmp.eq.s32.totalorder %v701, 1
      %vm708 = vcmp.eq.s32.totalorder %v702, 1
      %vm709 = vcmp.eq.s32.totalorder %v703, 1
      %v710 = vsel %vm704, %v687, 0.0
      %v711 = vsel %vm705, %v688, 0.0
      %v712 = vsel %vm706, %v689, 0.0
      %v713 = vsel %vm707, %v690, 0.0
      %v714 = vsel %vm708, %v691, 0.0
      %v715 = vpack.c.bf16 %v710, %v710
      %v716 = vpack.c.bf16 %v711, %v711
      %v717 = vpack.c.bf16 %v712, %v712
      %v718 = vpack.c.bf16 %v713, %v713
      %v719 = vpack.c.bf16 %v714, %v714
      %v725 = vrot.slane %v715, 4
      %v726 = vrot.slane %v716, 4
      %v727 = vrot.slane %v717, 4
      %v728 = vrot.slane %v718, 4
      %v729 = vrot.slane %v719, 4
      %730 = vrot.lane.b32.xlu0 %v725, 127
      %v731 = vpop.permute.xlu0 %730
      %732 = vrot.lane.b32.xlu0 %v726, 127
      %v733 = vpop.permute.xlu0 %732
      %734 = vrot.lane.b32.xlu0 %v727, 127
      %v735 = vpop.permute.xlu0 %734
      %736 = vrot.lane.b32.xlu0 %v728, 127
      %v737 = vpop.permute.xlu0 %736
      %738 = vrot.lane.b32.xlu0 %v729, 127
      %v739 = vpop.permute.xlu0 %738
      %vm740 = vcmask 1039360
      %v741 = vsel %vm740, %v731, %v733
      %v742 = vsel %vm740, %v733, %v735
      %v743 = vsel %vm740, %v735, %v737
      %v744 = vsel %vm740, %v737, %v739
      %745 = vrot.lane.b32.xlu0 %v715, 126
      %v746 = vpop.permute.xlu0 %745
      %747 = vrot.lane.b32.xlu0 %v716, 126
      %v748 = vpop.permute.xlu0 %747
      %749 = vrot.lane.b32.xlu0 %v717, 126
      %v750 = vpop.permute.xlu0 %749
      %751 = vrot.lane.b32.xlu0 %v718, 126
      %v752 = vpop.permute.xlu0 %751
      %753 = vrot.lane.b32.xlu0 %v719, 126
      %v754 = vpop.permute.xlu0 %753
      %vm755 = vcmask 1031168
      %v756 = vsel %vm755, %v746, %v748
      %v757 = vsel %vm755, %v748, %v750
      %v758 = vsel %vm755, %v750, %v752
      %v759 = vsel %vm755, %v752, %v754
      %760 = vrot.lane.b32.xlu0 %v725, 96
      %v761 = vpop.permute.xlu0 %760
      %762 = vrot.lane.b32.xlu0 %v726, 96
      %v763 = vpop.permute.xlu0 %762
      %764 = vrot.lane.b32.xlu0 %v727, 96
      %v765 = vpop.permute.xlu0 %764
      %766 = vrot.lane.b32.xlu0 %v728, 96
      %v767 = vpop.permute.xlu0 %766
      %768 = vrot.lane.b32.xlu0 %v729, 96
      %v769 = vpop.permute.xlu0 %768
      %vm770 = vcmask 785408
      %v771 = vsel %vm770, %v761, %v763
      %v772 = vsel %vm770, %v763, %v765
      %v773 = vsel %vm770, %v765, %v767
      %v774 = vsel %vm770, %v767, %v769
      %775 = vrot.lane.b32.xlu0 %v715, 95
      %v776 = vpop.permute.xlu0 %775
      %777 = vrot.lane.b32.xlu0 %v716, 95
      %v778 = vpop.permute.xlu0 %777
      %779 = vrot.lane.b32.xlu0 %v717, 95
      %v780 = vpop.permute.xlu0 %779
      %781 = vrot.lane.b32.xlu0 %v718, 95
      %v782 = vpop.permute.xlu0 %781
      %783 = vrot.lane.b32.xlu0 %v719, 95
      %v784 = vpop.permute.xlu0 %783
      %vm785 = vcmask 777216
      %v786 = vsel %vm785, %v776, %v778
      %v787 = vsel %vm785, %v778, %v780
      %v788 = vsel %vm785, %v780, %v782
      %v789 = vsel %vm785, %v782, %v784
      %790 = vrot.lane.b32.xlu0 %v725, 94
      %v791 = vpop.permute.xlu0 %790
      %792 = vrot.lane.b32.xlu0 %v726, 94
      %v793 = vpop.permute.xlu0 %792
      %794 = vrot.lane.b32.xlu0 %v727, 94
      %v795 = vpop.permute.xlu0 %794
      %796 = vrot.lane.b32.xlu0 %v728, 94
      %v797 = vpop.permute.xlu0 %796
      %798 = vrot.lane.b32.xlu0 %v729, 94
      %v799 = vpop.permute.xlu0 %798
      %vm800 = vcmask 769024
      %v801 = vsel %vm800, %v791, %v793
      %v802 = vsel %vm800, %v793, %v795
      %v803 = vsel %vm800, %v795, %v797
      %v804 = vsel %vm800, %v797, %v799
      %805 = vrot.lane.b32.xlu0 %v715, 64
      %v806 = vpop.permute.xlu0 %805
      %807 = vrot.lane.b32.xlu0 %v716, 64
      %v808 = vpop.permute.xlu0 %807
      %809 = vrot.lane.b32.xlu0 %v717, 64
      %v810 = vpop.permute.xlu0 %809
      %811 = vrot.lane.b32.xlu0 %v718, 64
      %v812 = vpop.permute.xlu0 %811
      %813 = vrot.lane.b32.xlu0 %v719, 64
      %v814 = vpop.permute.xlu0 %813
      %vm815 = vcmask 523264
      %v816 = vsel %vm815, %v806, %v808
      %v817 = vsel %vm815, %v808, %v810
      %v818 = vsel %vm815, %v810, %v812
      %v819 = vsel %vm815, %v812, %v814
      %820 = vrot.lane.b32.xlu0 %v725, 63
      %v821 = vpop.permute.xlu0 %820
      %822 = vrot.lane.b32.xlu0 %v726, 63
      %v823 = vpop.permute.xlu0 %822
      %824 = vrot.lane.b32.xlu0 %v727, 63
      %v825 = vpop.permute.xlu0 %824
      %826 = vrot.lane.b32.xlu0 %v728, 63
      %v827 = vpop.permute.xlu0 %826
      %828 = vrot.lane.b32.xlu0 %v729, 63
      %v829 = vpop.permute.xlu0 %828
      %vm830 = vcmask 515072
      %v831 = vsel %vm830, %v821, %v823
      %v832 = vsel %vm830, %v823, %v825
      %v833 = vsel %vm830, %v825, %v827
      %v834 = vsel %vm830, %v827, %v829
      %835 = vrot.lane.b32.xlu0 %v715, 62
      %v836 = vpop.permute.xlu0 %835
      %837 = vrot.lane.b32.xlu0 %v716, 62
      %v838 = vpop.permute.xlu0 %837
      %839 = vrot.lane.b32.xlu0 %v717, 62
      %v840 = vpop.permute.xlu0 %839
      %841 = vrot.lane.b32.xlu0 %v718, 62
      %v842 = vpop.permute.xlu0 %841
      %843 = vrot.lane.b32.xlu0 %v719, 62
      %v844 = vpop.permute.xlu0 %843
      %vm845 = vcmask 506880
      %v846 = vsel %vm845, %v836, %v838
      %v847 = vsel %vm845, %v838, %v840
      %v848 = vsel %vm845, %v840, %v842
      %v849 = vsel %vm845, %v842, %v844
      %v852 = vsel %vm502, %v715, %v741
      %v855 = vsel %vm502, %v716, %v742
      %v858 = vsel %vm502, %v717, %v743
      %v861 = vsel %vm502, %v718, %v744
      %v864 = vsel %vm502, %v719, %v739
      %v867 = vsel %vm502, %v756, %v771
      %v870 = vsel %vm502, %v757, %v772
      %v873 = vsel %vm502, %v758, %v773
      %v876 = vsel %vm502, %v759, %v774
      %v879 = vsel %vm502, %v754, %v769
      %v882 = vsel %vm502, %v786, %v801
      %v885 = vsel %vm502, %v787, %v802
      %v888 = vsel %vm502, %v788, %v803
      %v891 = vsel %vm502, %v789, %v804
      %v894 = vsel %vm502, %v784, %v799
      %v897 = vsel %vm502, %v816, %v831
      %v900 = vsel %vm502, %v817, %v832
      %v903 = vsel %vm502, %v818, %v833
      %v906 = vsel %vm502, %v819, %v834
      %v909 = vsel %vm502, %v814, %v829
      %v910 = vld [vmem:[%s3] sm:$0xf]
      %v911 = vld [vmem:[%s3 + $0x4] sm:$0xf]
      %v912 = vld [vmem:[%s4] sm:$0xff]
      %v913 = vld [vmem:[%s4 + $0x8] sm:$0xff]
      %915 = vset.pattern.permute.xlu0 0
      %916 = vperm.xlu0 %915, %v912
      %v917 = vpop.permute.xlu0 %916
      %920 = vset.pattern.permute.xlu0 0
      %921 = vperm.xlu0 %920, %v913
      %v922 = vpop.permute.xlu0 %921
      %v926 = vunpack.c.l.b16 %v910
      %v927 = vunpack.c.l.b16 %v911
      %v928 = vpack.c.b16 %v927, %v926
      %949 = vrot.lane.b32.xlu0 %v852, 95
      %v950 = vpop.permute.xlu0 %949
      %951 = vrot.lane.b32.xlu0 %v855, 95
      %v952 = vpop.permute.xlu0 %951
      %953 = vrot.lane.b32.xlu0 %v858, 95
      %v954 = vpop.permute.xlu0 %953
      %955 = vrot.lane.b32.xlu0 %v861, 95
      %v956 = vpop.permute.xlu0 %955
      %957 = vrot.lane.b32.xlu0 %v864, 95
      %v958 = vpop.permute.xlu0 %957
      %959 = vrot.lane.b32.xlu0 %v867, 95
      %v960 = vpop.permute.xlu0 %959
      %961 = vrot.lane.b32.xlu0 %v870, 95
      %v962 = vpop.permute.xlu0 %961
      %963 = vrot.lane.b32.xlu0 %v873, 95
      %v964 = vpop.permute.xlu0 %963
      %965 = vrot.lane.b32.xlu0 %v876, 95
      %v966 = vpop.permute.xlu0 %965
      %967 = vrot.lane.b32.xlu0 %v879, 95
      %v968 = vpop.permute.xlu0 %967
      %969 = vrot.lane.b32.xlu0 %v882, 95
      %v970 = vpop.permute.xlu0 %969
      %971 = vrot.lane.b32.xlu0 %v885, 95
      %v972 = vpop.permute.xlu0 %971
      %973 = vrot.lane.b32.xlu0 %v888, 95
      %v974 = vpop.permute.xlu0 %973
      %975 = vrot.lane.b32.xlu0 %v891, 95
      %v976 = vpop.permute.xlu0 %975
      %977 = vrot.lane.b32.xlu0 %v894, 95
      %v978 = vpop.permute.xlu0 %977
      %979 = vrot.lane.b32.xlu0 %v897, 95
      %v980 = vpop.permute.xlu0 %979
      %981 = vrot.lane.b32.xlu0 %v900, 95
      %v982 = vpop.permute.xlu0 %981
      %983 = vrot.lane.b32.xlu0 %v903, 95
      %v984 = vpop.permute.xlu0 %983
      %985 = vrot.lane.b32.xlu0 %v906, 95
      %v986 = vpop.permute.xlu0 %985
      %987 = vrot.lane.b32.xlu0 %v909, 95
      %v988 = vpop.permute.xlu0 %987
      %989 = vrot.lane.b32.xlu0 %v846, 95
      %v990 = vpop.permute.xlu0 %989
      %991 = vrot.lane.b32.xlu0 %v847, 95
      %v992 = vpop.permute.xlu0 %991
      %993 = vrot.lane.b32.xlu0 %v848, 95
      %v994 = vpop.permute.xlu0 %993
      %995 = vrot.lane.b32.xlu0 %v849, 95
      %v996 = vpop.permute.xlu0 %995
      %997 = vrot.lane.b32.xlu0 %v844, 95
      %v998 = vpop.permute.xlu0 %997
      %v999 = vsel %vm785, %v950, %v952
      %v1000 = vsel %vm785, %v952, %v954
      %v1001 = vsel %vm785, %v954, %v956
      %v1002 = vsel %vm785, %v956, %v958
      %v1003 = vsel %vm785, %v960, %v962
      %v1004 = vsel %vm785, %v962, %v964
      %v1005 = vsel %vm785, %v964, %v966
      %v1006 = vsel %vm785, %v966, %v968
      %v1007 = vsel %vm785, %v970, %v972
      %v1008 = vsel %vm785, %v972, %v974
      %v1009 = vsel %vm785, %v974, %v976
      %v1010 = vsel %vm785, %v976, %v978
      %v1011 = vsel %vm785, %v980, %v982
      %v1012 = vsel %vm785, %v982, %v984
      %v1013 = vsel %vm785, %v984, %v986
      %v1014 = vsel %vm785, %v986, %v988
      %v1015 = vsel %vm785, %v990, %v992
      %v1016 = vsel %vm785, %v992, %v994
      %v1017 = vsel %vm785, %v994, %v996
      %v1018 = vsel %vm785, %v996, %v998
      %vm1035 = vcmask 588800
      %v1037 = vsel %vm1035, %v928, 0
      %v1040 = vsel %vm502, %v1015, 0
      %v1043 = vsel %vm502, %v1016, 0
      %v1046 = vsel %vm502, %v1017, 0
      %v1049 = vsel %vm502, %v1018, 0
      %1051 = vmatprep.subr.bf16.mxu0 0
      %1052 = vmatpush1.bf16.msra.mxu0 0
      %1053 = vmatprep.subr.bf16.mxu0 0
      %1054 = vmatpush1.bf16.msra.mxu0 0
      %1055 = vmatprep.subr.bf16.mxu0 0
      %1056 = vmatpush1.bf16.msra.mxu0 0
      %1057 = vmatprep.subr.bf16.mxu0 %v1043
      %1058 = vmatpush1.bf16.msra.mxu0 %v1040
      %1059 = vmatprep.subr.bf16.mxu0 %v1012
      %1060 = vmatpush1.bf16.msra.mxu0 %v1011
      %1061 = vmatprep.subr.bf16.mxu0 %v1008
      %1062 = vmatpush1.bf16.msra.mxu0 %v1007
      %1063 = vmatprep.subr.bf16.mxu0 %v1004
      %1064 = vmatpush1.bf16.msra.mxu0 %v1003
      %1065 = vmatprep.subr.bf16.mxu0 %v1000
      %1066 = vmatpush1.bf16.msra.mxu0 %v999
      %1067 = vmatprep.subr.bf16.mxu0 0
      %1068 = vmatpush2.bf16.msra.mxu0 0
      %1069 = vmatprep.subr.bf16.mxu0 0
      %1070 = vmatpush2.bf16.msra.mxu0 0
      %1071 = vmatprep.subr.bf16.mxu0 0
      %1072 = vmatpush2.bf16.msra.mxu0 0
      %1073 = vmatprep.subr.bf16.mxu0 0
      %1074 = vmatpush2.bf16.msra.mxu0 0
      %1075 = vmatprep.subr.bf16.mxu0 0
      %1076 = vmatpush2.bf16.msra.mxu0 0
      %1077 = vmatprep.subr.bf16.mxu0 0
      %1078 = vmatpush2.bf16.msra.mxu0 0
      %1079 = vmatprep.subr.bf16.mxu0 0
      %1080 = vmatpush2.bf16.msra.mxu0 0
      %1081 = vmatprep.subr.bf16.mxu0 0
      %1082 = vmatpush2.bf16.msra.mxu0 0
      %1083 = vmatprep.mubr.bf16.mxu0 0
      %1084 = vmatmul.mubr.bf16.gmra.mxu0 %v1037
      %v1085 = vpop.f32.mrf.mxu0
      %v1086 = vadd.f32 %v917, %v1085
      %v1087 = vpop.f32.mrf.mxu0
      %v1088 = vadd.f32 %v917, %v1087
      %v1089 = vpop.f32.mrf.mxu0
      %v1090 = vadd.f32 %v922, %v1089
      %v1091 = vpop.f32.mrf.mxu0
      %v1092 = vadd.f32 %v922, %v1091
      %1093 = vdwg.mxu0
      %1094 = vmatprep.subr.bf16.mxu0 0
      %1095 = vmatpush1.bf16.msra.mxu0 0
      %1096 = vmatprep.subr.bf16.mxu0 0
      %1097 = vmatpush1.bf16.msra.mxu0 0
      %1098 = vmatprep.subr.bf16.mxu0 0
      %1099 = vmatpush1.bf16.msra.mxu0 0
      %1100 = vmatprep.subr.bf16.mxu0 %v1049
      %1101 = vmatpush1.bf16.msra.mxu0 %v1046
      %1102 = vmatprep.subr.bf16.mxu0 %v1014
      %1103 = vmatpush1.bf16.msra.mxu0 %v1013
      %1104 = vmatprep.subr.bf16.mxu0 %v1010
      %1105 = vmatpush1.bf16.msra.mxu0 %v1009
      %1106 = vmatprep.subr.bf16.mxu0 %v1006
      %1107 = vmatpush1.bf16.msra.mxu0 %v1005
      %1108 = vmatprep.subr.bf16.mxu0 %v1002
      %1109 = vmatpush1.bf16.msra.mxu0 %v1001
      %1110 = vmatprep.subr.bf16.mxu0 0
      %1111 = vmatpush2.bf16.msra.mxu0 0
      %1112 = vmatprep.subr.bf16.mxu0 0
      %1113 = vmatpush2.bf16.msra.mxu0 0
      %1114 = vmatprep.subr.bf16.mxu0 0
      %1115 = vmatpush2.bf16.msra.mxu0 0
      %1116 = vmatprep.subr.bf16.mxu0 0
      %1117 = vmatpush2.bf16.msra.mxu0 0
      %1118 = vmatprep.subr.bf16.mxu0 0
      %1119 = vmatpush2.bf16.msra.mxu0 0
      %1120 = vmatprep.subr.bf16.mxu0 0
      %1121 = vmatpush2.bf16.msra.mxu0 0
      %1122 = vmatprep.subr.bf16.mxu0 0
      %1123 = vmatpush2.bf16.msra.mxu0 0
      %1124 = vmatprep.subr.bf16.mxu0 0
      %1125 = vmatpush2.bf16.msra.mxu0 0
      %1126 = vmatprep.mubr.bf16.mxu0 0
      %1127 = vmatmul.mubr.bf16.gmra.mxu0 %v1037
      %v1128 = vpop.f32.mrf.mxu0
      %v1129 = vadd.f32 %v917, %v1128
      %v1130 = vpop.f32.mrf.mxu0
      %v1131 = vadd.f32 %v917, %v1130
      %v1132 = vpop.f32.mrf.mxu0
      %v1133 = vadd.f32 %v922, %v1132
      %v1134 = vpop.f32.mrf.mxu0
      %v1135 = vadd.f32 %v922, %v1134
      %1136 = vdwg.mxu0
      %v1137 = vmax.f32 %v1086, 0.0
      %v1138 = vmax.f32 %v1088, 0.0
      %v1139 = vmax.f32 %v1129, 0.0
      %v1140 = vmax.f32 %v1131, 0.0
      %v1141 = vmax.f32 %v1090, 0.0
      %v1142 = vmax.f32 %v1092, 0.0
      %v1143 = vmax.f32 %v1133, 0.0
      %v1144 = vmax.f32 %v1135, 0.0
      %v1145 = vsel %vm704, %v692, 0.0
      %v1146 = vsel %vm705, %v693, 0.0
      %v1147 = vsel %vm706, %v694, 0.0
      %v1148 = vsel %vm707, %v695, 0.0
      %v1149 = vsel %vm708, %v696, 0.0
      %v1150 = vsel %vm709, %v697, 0.0
      %v1151 = vpack.c.bf16 %v1145, %v1145
      %v1152 = vpack.c.bf16 %v1146, %v1146
      %v1153 = vpack.c.bf16 %v1147, %v1147
      %v1154 = vpack.c.bf16 %v1148, %v1148
      %v1155 = vpack.c.bf16 %v1149, %v1149
      %v1156 = vpack.c.bf16 %v1150, %v1150
      %v1162 = vrot.slane %v1151, 4
      %v1163 = vrot.slane %v1152, 4
      %v1164 = vrot.slane %v1153, 4
      %v1165 = vrot.slane %v1154, 4
      %v1166 = vrot.slane %v1155, 4
      %1167 = vrot.lane.b32.xlu0 %v1162, 127
      %v1168 = vpop.permute.xlu0 %1167
      %1169 = vrot.lane.b32.xlu0 %v1163, 127
      %v1170 = vpop.permute.xlu0 %1169
      %1171 = vrot.lane.b32.xlu0 %v1164, 127
      %v1172 = vpop.permute.xlu0 %1171
      %1173 = vrot.lane.b32.xlu0 %v1165, 127
      %v1174 = vpop.permute.xlu0 %1173
      %1175 = vrot.lane.b32.xlu0 %v1166, 127
      %v1176 = vpop.permute.xlu0 %1175
      %v1177 = vsel %vm740, %v1168, %v1170
      %v1178 = vsel %vm740, %v1170, %v1172
      %v1179 = vsel %vm740, %v1172, %v1174
      %v1180 = vsel %vm740, %v1174, %v1176
      %1181 = vrot.lane.b32.xlu0 %v1151, 126
      %v1182 = vpop.permute.xlu0 %1181
      %1183 = vrot.lane.b32.xlu0 %v1152, 126
      %v1184 = vpop.permute.xlu0 %1183
      %1185 = vrot.lane.b32.xlu0 %v1153, 126
      %v1186 = vpop.permute.xlu0 %1185
      %1187 = vrot.lane.b32.xlu0 %v1154, 126
      %v1188 = vpop.permute.xlu0 %1187
      %1189 = vrot.lane.b32.xlu0 %v1155, 126
      %v1190 = vpop.permute.xlu0 %1189
      %v1191 = vsel %vm755, %v1182, %v1184
      %v1192 = vsel %vm755, %v1184, %v1186
      %v1193 = vsel %vm755, %v1186, %v1188
      %v1194 = vsel %vm755, %v1188, %v1190
      %1195 = vrot.lane.b32.xlu0 %v1162, 125
      %v1196 = vpop.permute.xlu0 %1195
      %1197 = vrot.lane.b32.xlu0 %v1163, 125
      %v1198 = vpop.permute.xlu0 %1197
      %1199 = vrot.lane.b32.xlu0 %v1164, 125
      %v1200 = vpop.permute.xlu0 %1199
      %1201 = vrot.lane.b32.xlu0 %v1165, 125
      %v1202 = vpop.permute.xlu0 %1201
      %1203 = vrot.lane.b32.xlu0 %v1166, 125
      %v1204 = vpop.permute.xlu0 %1203
      %vm1205 = vcmask 1022976
      %v1206 = vsel %vm1205, %v1196, %v1198
      %v1207 = vsel %vm1205, %v1198, %v1200
      %v1208 = vsel %vm1205, %v1200, %v1202
      %v1209 = vsel %vm1205, %v1202, %v1204
      %1210 = vrot.lane.b32.xlu0 %v1151, 124
      %v1211 = vpop.permute.xlu0 %1210
      %1212 = vrot.lane.b32.xlu0 %v1152, 124
      %v1213 = vpop.permute.xlu0 %1212
      %1214 = vrot.lane.b32.xlu0 %v1153, 124
      %v1215 = vpop.permute.xlu0 %1214
      %1216 = vrot.lane.b32.xlu0 %v1154, 124
      %v1217 = vpop.permute.xlu0 %1216
      %1218 = vrot.lane.b32.xlu0 %v1155, 124
      %v1219 = vpop.permute.xlu0 %1218
      %vm1220 = vcmask 1014784
      %v1221 = vsel %vm1220, %v1211, %v1213
      %v1222 = vsel %vm1220, %v1213, %v1215
      %v1223 = vsel %vm1220, %v1215, %v1217
      %v1224 = vsel %vm1220, %v1217, %v1219
      %v1227 = vsel %vm502, %v1151, %v1177
      %v1231 = vsel %vm502, %v1152, %v1178
      %v1235 = vsel %vm502, %v1153, %v1179
      %v1239 = vsel %vm502, %v1154, %v1180
      %v1243 = vsel %vm502, %v1191, %v1206
      %v1247 = vsel %vm502, %v1192, %v1207
      %v1251 = vsel %vm502, %v1193, %v1208
      %v1255 = vsel %vm502, %v1194, %v1209
      %v1257 = vld [vmem:[%s5] sm:$0xf]
      %v1258 = vld [vmem:[%s5 + $0x4] sm:$0xf]
      %v1261 = vsel %vm502, %v1155, %v1176
      %v1264 = vsel %vm502, %v1190, %v1204
      %s1265 = scalar_lea.vmem %s5, 8
      %v1266 = vld [vmem:[%s1265] sm:$0xf]
      %v1267 = vld [vmem:[%s1265 + $0x4] sm:$0xf]
      %v1270 = vunpack.c.l.b16 %v1266
      %v1271 = vunpack.c.l.b16 %v1267
      %v1272 = vpack.c.b16 %v1271, %v1270
      %1283 = vrot.lane.b32.xlu0 %v1227, 96
      %v1284 = vpop.permute.xlu0 %1283
      %1285 = vrot.lane.b32.xlu0 %v1231, 96
      %v1286 = vpop.permute.xlu0 %1285
      %1287 = vrot.lane.b32.xlu0 %v1235, 96
      %v1288 = vpop.permute.xlu0 %1287
      %1289 = vrot.lane.b32.xlu0 %v1239, 96
      %v1290 = vpop.permute.xlu0 %1289
      %1291 = vrot.lane.b32.xlu0 %v1261, 96
      %v1292 = vpop.permute.xlu0 %1291
      %1293 = vrot.lane.b32.xlu0 %v1243, 96
      %v1294 = vpop.permute.xlu0 %1293
      %1295 = vrot.lane.b32.xlu0 %v1247, 96
      %v1296 = vpop.permute.xlu0 %1295
      %1297 = vrot.lane.b32.xlu0 %v1251, 96
      %v1298 = vpop.permute.xlu0 %1297
      %1299 = vrot.lane.b32.xlu0 %v1255, 96
      %v1300 = vpop.permute.xlu0 %1299
      %1301 = vrot.lane.b32.xlu0 %v1264, 96
      %v1302 = vpop.permute.xlu0 %1301
      %1303 = vrot.lane.b32.xlu0 %v1221, 96
      %v1304 = vpop.permute.xlu0 %1303
      %1305 = vrot.lane.b32.xlu0 %v1222, 96
      %v1306 = vpop.permute.xlu0 %1305
      %1307 = vrot.lane.b32.xlu0 %v1223, 96
      %v1308 = vpop.permute.xlu0 %1307
      %1309 = vrot.lane.b32.xlu0 %v1224, 96
      %v1310 = vpop.permute.xlu0 %1309
      %1311 = vrot.lane.b32.xlu0 %v1219, 96
      %v1312 = vpop.permute.xlu0 %1311
      %v1313 = vsel %vm770, %v1284, %v1286
      %v1314 = vsel %vm770, %v1286, %v1288
      %v1315 = vsel %vm770, %v1288, %v1290
      %v1316 = vsel %vm770, %v1290, %v1292
      %v1317 = vsel %vm770, %v1294, %v1296
      %v1318 = vsel %vm770, %v1296, %v1298
      %v1319 = vsel %vm770, %v1298, %v1300
      %v1320 = vsel %vm770, %v1300, %v1302
      %v1321 = vsel %vm770, %v1304, %v1306
      %v1322 = vsel %vm770, %v1306, %v1308
      %v1323 = vsel %vm770, %v1308, %v1310
      %v1324 = vsel %vm770, %v1310, %v1312
      %vm1333 = vcmask 326656
      %v1335 = vsel %vm1333, %v1272, 0
      %v1338 = vsel %vm502, %v1321, 0
      %v1341 = vsel %vm502, %v1322, 0
      %v1344 = vsel %vm502, %v1323, 0
      %v1347 = vsel %vm502, %v1324, 0
      %1349 = vmatprep.subr.bf16.mxu0 0
      %1350 = vmatpush1.bf16.msra.mxu0 0
      %1351 = vmatprep.subr.bf16.mxu0 0
      %1352 = vmatpush1.bf16.msra.mxu0 0
      %1353 = vmatprep.subr.bf16.mxu0 0
      %1354 = vmatpush1.bf16.msra.mxu0 0
      %1355 = vmatprep.subr.bf16.mxu0 0
      %1356 = vmatpush1.bf16.msra.mxu0 0
      %1357 = vmatprep.subr.bf16.mxu0 0
      %1358 = vmatpush1.bf16.msra.mxu0 0
      %1359 = vmatprep.subr.bf16.mxu0 %v1341
      %1360 = vmatpush1.bf16.msra.mxu0 %v1338
      %1361 = vmatprep.subr.bf16.mxu0 %v1318
      %1362 = vmatpush1.bf16.msra.mxu0 %v1317
      %1363 = vmatprep.subr.bf16.mxu0 %v1314
      %1364 = vmatpush1.bf16.msra.mxu0 %v1313
      %1365 = vmatprep.subr.bf16.mxu0 0
      %1366 = vmatpush2.bf16.msra.mxu0 0
      %1367 = vmatprep.subr.bf16.mxu0 0
      %1368 = vmatpush2.bf16.msra.mxu0 0
      %1369 = vmatprep.subr.bf16.mxu0 0
      %1370 = vmatpush2.bf16.msra.mxu0 0
      %1371 = vmatprep.subr.bf16.mxu0 0
      %1372 = vmatpush2.bf16.msra.mxu0 0
      %1373 = vmatprep.subr.bf16.mxu0 0
      %1374 = vmatpush2.bf16.msra.mxu0 0
      %1375 = vmatprep.subr.bf16.mxu0 0
      %1376 = vmatpush2.bf16.msra.mxu0 0
      %1377 = vmatprep.subr.bf16.mxu0 0
      %1378 = vmatpush2.bf16.msra.mxu0 0
      %1379 = vmatprep.subr.bf16.mxu0 0
      %1380 = vmatpush2.bf16.msra.mxu0 0
      %1381 = vmatprep.mubr.bf16.mxu0 0
      %1382 = vmatmul.mubr.bf16.gmra.mxu0 %v1335
      %v1383 = vpop.f32.mrf.mxu0
      %v1384 = vadd.f32 0.0, %v1383
      %v1385 = vpop.f32.mrf.mxu0
      %v1386 = vadd.f32 0.0, %v1385
      %v1387 = vpop.f32.mrf.mxu0
      %v1388 = vadd.f32 0.0, %v1387
      %v1389 = vpop.f32.mrf.mxu0
      %v1390 = vadd.f32 0.0, %v1389
      %1391 = vdwg.mxu0
      %1392 = vmatprep.subr.bf16.mxu0 0
      %1393 = vmatpush1.bf16.msra.mxu0 0
      %1394 = vmatprep.subr.bf16.mxu0 0
      %1395 = vmatpush1.bf16.msra.mxu0 0
      %1396 = vmatprep.subr.bf16.mxu0 0
      %1397 = vmatpush1.bf16.msra.mxu0 0
      %1398 = vmatprep.subr.bf16.mxu0 0
      %1399 = vmatpush1.bf16.msra.mxu0 0
      %1400 = vmatprep.subr.bf16.mxu0 0
      %1401 = vmatpush1.bf16.msra.mxu0 0
      %1402 = vmatprep.subr.bf16.mxu0 %v1347
      %1403 = vmatpush1.bf16.msra.mxu0 %v1344
      %1404 = vmatprep.subr.bf16.mxu0 %v1320
      %1405 = vmatpush1.bf16.msra.mxu0 %v1319
      %1406 = vmatprep.subr.bf16.mxu0 %v1316
      %1407 = vmatpush1.bf16.msra.mxu0 %v1315
      %1408 = vmatprep.subr.bf16.mxu0 0
      %1409 = vmatpush2.bf16.msra.mxu0 0
      %1410 = vmatprep.subr.bf16.mxu0 0
      %1411 = vmatpush2.bf16.msra.mxu0 0
      %1412 = vmatprep.subr.bf16.mxu0 0
      %1413 = vmatpush2.bf16.msra.mxu0 0
      %1414 = vmatprep.subr.bf16.mxu0 0
      %1415 = vmatpush2.bf16.msra.mxu0 0
      %1416 = vmatprep.subr.bf16.mxu0 0
      %1417 = vmatpush2.bf16.msra.mxu0 0
      %1418 = vmatprep.subr.bf16.mxu0 0
      %1419 = vmatpush2.bf16.msra.mxu0 0
      %1420 = vmatprep.subr.bf16.mxu0 0
      %1421 = vmatpush2.bf16.msra.mxu0 0
      %1422 = vmatprep.subr.bf16.mxu0 0
      %1423 = vmatpush2.bf16.msra.mxu0 0
      %1424 = vmatprep.mubr.bf16.mxu0 0
      %1425 = vmatmul.mubr.bf16.gmra.mxu0 %v1335
      %v1426 = vpop.f32.mrf.mxu0
      %v1427 = vadd.f32 0.0, %v1426
      %v1428 = vpop.f32.mrf.mxu0
      %v1429 = vadd.f32 0.0, %v1428
      %v1430 = vpop.f32.mrf.mxu0
      %v1431 = vadd.f32 0.0, %v1430
      %v1432 = vpop.f32.mrf.mxu0
      %v1433 = vadd.f32 0.0, %v1432
      %1434 = vdwg.mxu0
      %v1437 = vunpack.c.l.b16 %v1257
      %v1438 = vunpack.c.l.b16 %v1258
      %v1439 = vpack.c.b16 %v1438, %v1437
      %v1441 = vsel %vm1333, %v1439, 0
      %v1444 = vsel %vm502, %v1221, 0
      %v1447 = vsel %vm502, %v1222, 0
      %v1450 = vsel %vm502, %v1223, 0
      %v1453 = vsel %vm502, %v1224, 0
      %1455 = vmatprep.subr.bf16.mxu0 0
      %1456 = vmatpush1.bf16.msra.mxu0 0
      %1457 = vmatprep.subr.bf16.mxu0 0
      %1458 = vmatpush1.bf16.msra.mxu0 0
      %1459 = vmatprep.subr.bf16.mxu0 0
      %1460 = vmatpush1.bf16.msra.mxu0 0
      %1461 = vmatprep.subr.bf16.mxu0 0
      %1462 = vmatpush1.bf16.msra.mxu0 0
      %1463 = vmatprep.subr.bf16.mxu0 0
      %1464 = vmatpush1.bf16.msra.mxu0 0
      %1465 = vmatprep.subr.bf16.mxu0 %v1447
      %1466 = vmatpush1.bf16.msra.mxu0 %v1444
      %1467 = vmatprep.subr.bf16.mxu0 %v1247
      %1468 = vmatpush1.bf16.msra.mxu0 %v1243
      %1469 = vmatprep.subr.bf16.mxu0 %v1231
      %1470 = vmatpush1.bf16.msra.mxu0 %v1227
      %1471 = vmatprep.subr.bf16.mxu0 0
      %1472 = vmatpush2.bf16.msra.mxu0 0
      %1473 = vmatprep.subr.bf16.mxu0 0
      %1474 = vmatpush2.bf16.msra.mxu0 0
      %1475 = vmatprep.subr.bf16.mxu0 0
      %1476 = vmatpush2.bf16.msra.mxu0 0
      %1477 = vmatprep.subr.bf16.mxu0 0
      %1478 = vmatpush2.bf16.msra.mxu0 0
      %1479 = vmatprep.subr.bf16.mxu0 0
      %1480 = vmatpush2.bf16.msra.mxu0 0
      %1481 = vmatprep.subr.bf16.mxu0 0
      %1482 = vmatpush2.bf16.msra.mxu0 0
      %1483 = vmatprep.subr.bf16.mxu0 0
      %1484 = vmatpush2.bf16.msra.mxu0 0
      %1485 = vmatprep.subr.bf16.mxu0 0
      %1486 = vmatpush2.bf16.msra.mxu0 0
      %1487 = vmatprep.mubr.bf16.mxu0 0
      %1488 = vmatmul.mubr.bf16.gmra.mxu0 %v1441
      %v1489 = vpop.f32.mrf.mxu0
      %v1490 = vadd.f32 %v1384, %v1489
      %v1491 = vpop.f32.mrf.mxu0
      %v1492 = vadd.f32 %v1386, %v1491
      %v1493 = vpop.f32.mrf.mxu0
      %v1494 = vadd.f32 %v1388, %v1493
      %v1495 = vpop.f32.mrf.mxu0
      %v1496 = vadd.f32 %v1390, %v1495
      %1497 = vdwg.mxu0
      %1498 = vmatprep.subr.bf16.mxu0 0
      %1499 = vmatpush1.bf16.msra.mxu0 0
      %1500 = vmatprep.subr.bf16.mxu0 0
      %1501 = vmatpush1.bf16.msra.mxu0 0
      %1502 = vmatprep.subr.bf16.mxu0 0
      %1503 = vmatpush1.bf16.msra.mxu0 0
      %1504 = vmatprep.subr.bf16.mxu0 0
      %1505 = vmatpush1.bf16.msra.mxu0 0
      %1506 = vmatprep.subr.bf16.mxu0 0
      %1507 = vmatpush1.bf16.msra.mxu0 0
      %1508 = vmatprep.subr.bf16.mxu0 %v1453
      %1509 = vmatpush1.bf16.msra.mxu0 %v1450
      %1510 = vmatprep.subr.bf16.mxu0 %v1255
      %1511 = vmatpush1.bf16.msra.mxu0 %v1251
      %1512 = vmatprep.subr.bf16.mxu0 %v1239
      %1513 = vmatpush1.bf16.msra.mxu0 %v1235
      %1514 = vmatprep.subr.bf16.mxu0 0
      %1515 = vmatpush2.bf16.msra.mxu0 0
      %1516 = vmatprep.subr.bf16.mxu0 0
      %1517 = vmatpush2.bf16.msra.mxu0 0
      %1518 = vmatprep.subr.bf16.mxu0 0
      %1519 = vmatpush2.bf16.msra.mxu0 0
      %1520 = vmatprep.subr.bf16.mxu0 0
      %1521 = vmatpush2.bf16.msra.mxu0 0
      %1522 = vmatprep.subr.bf16.mxu0 0
      %1523 = vmatpush2.bf16.msra.mxu0 0
      %1524 = vmatprep.subr.bf16.mxu0 0
      %1525 = vmatpush2.bf16.msra.mxu0 0
      %1526 = vmatprep.subr.bf16.mxu0 0
      %1527 = vmatpush2.bf16.msra.mxu0 0
      %1528 = vmatprep.subr.bf16.mxu0 0
      %1529 = vmatpush2.bf16.msra.mxu0 0
      %1530 = vmatprep.mubr.bf16.mxu0 0
      %1531 = vmatmul.mubr.bf16.gmra.mxu0 %v1441
      %v1532 = vpop.f32.mrf.mxu0
      %v1533 = vadd.f32 %v1427, %v1532
      %v1534 = vpop.f32.mrf.mxu0
      %v1535 = vadd.f32 %v1429, %v1534
      %v1536 = vpop.f32.mrf.mxu0
      %v1537 = vadd.f32 %v1431, %v1536
      %v1538 = vpop.f32.mrf.mxu0
      %v1539 = vadd.f32 %v1433, %v1538
      %1540 = vdwg.mxu0
      %s1541 = scalar_lea.vmem %s5, 16
      %v1542 = vld [vmem:[%s1541] sm:$0xf]
      %v1543 = vld [vmem:[%s1541 + $0x4] sm:$0xf]
      %v1546 = vunpack.c.l.b16 %v1542
      %v1547 = vunpack.c.l.b16 %v1543
      %v1548 = vpack.c.b16 %v1547, %v1546
      %1549 = vrot.lane.b32.xlu0 %v1227, 64
      %v1550 = vpop.permute.xlu0 %1549
      %1551 = vrot.lane.b32.xlu0 %v1231, 64
      %v1552 = vpop.permute.xlu0 %1551
      %1553 = vrot.lane.b32.xlu0 %v1235, 64
      %v1554 = vpop.permute.xlu0 %1553
      %1555 = vrot.lane.b32.xlu0 %v1239, 64
      %v1556 = vpop.permute.xlu0 %1555
      %1557 = vrot.lane.b32.xlu0 %v1261, 64
      %v1558 = vpop.permute.xlu0 %1557
      %1559 = vrot.lane.b32.xlu0 %v1243, 64
      %v1560 = vpop.permute.xlu0 %1559
      %1561 = vrot.lane.b32.xlu0 %v1247, 64
      %v1562 = vpop.permute.xlu0 %1561
      %1563 = vrot.lane.b32.xlu0 %v1251, 64
      %v1564 = vpop.permute.xlu0 %1563
      %1565 = vrot.lane.b32.xlu0 %v1255, 64
      %v1566 = vpop.permute.xlu0 %1565
      %1567 = vrot.lane.b32.xlu0 %v1264, 64
      %v1568 = vpop.permute.xlu0 %1567
      %1569 = vrot.lane.b32.xlu0 %v1221, 64
      %v1570 = vpop.permute.xlu0 %1569
      %1571 = vrot.lane.b32.xlu0 %v1222, 64
      %v1572 = vpop.permute.xlu0 %1571
      %1573 = vrot.lane.b32.xlu0 %v1223, 64
      %v1574 = vpop.permute.xlu0 %1573
      %1575 = vrot.lane.b32.xlu0 %v1224, 64
      %v1576 = vpop.permute.xlu0 %1575
      %1577 = vrot.lane.b32.xlu0 %v1219, 64
      %v1578 = vpop.permute.xlu0 %1577
      %v1579 = vsel %vm815, %v1550, %v1552
      %v1580 = vsel %vm815, %v1552, %v1554
      %v1581 = vsel %vm815, %v1554, %v1556
      %v1582 = vsel %vm815, %v1556, %v1558
      %v1583 = vsel %vm815, %v1560, %v1562
      %v1584 = vsel %vm815, %v1562, %v1564
      %v1585 = vsel %vm815, %v1564, %v1566
      %v1586 = vsel %vm815, %v1566, %v1568
      %v1587 = vsel %vm815, %v1570, %v1572
      %v1588 = vsel %vm815, %v1572, %v1574
      %v1589 = vsel %vm815, %v1574, %v1576
      %v1590 = vsel %vm815, %v1576, %v1578
      %v1600 = vsel %vm1333, %v1548, 0
      %v1603 = vsel %vm502, %v1587, 0
      %v1606 = vsel %vm502, %v1588, 0
      %v1609 = vsel %vm502, %v1589, 0
      %v1612 = vsel %vm502, %v1590, 0
      %1614 = vmatprep.subr.bf16.mxu0 0
      %1615 = vmatpush1.bf16.msra.mxu0 0
      %1616 = vmatprep.subr.bf16.mxu0 0
      %1617 = vmatpush1.bf16.msra.mxu0 0
      %1618 = vmatprep.subr.bf16.mxu0 0
      %1619 = vmatpush1.bf16.msra.mxu0 0
      %1620 = vmatprep.subr.bf16.mxu0 0
      %1621 = vmatpush1.bf16.msra.mxu0 0
      %1622 = vmatprep.subr.bf16.mxu0 0
      %1623 = vmatpush1.bf16.msra.mxu0 0
      %1624 = vmatprep.subr.bf16.mxu0 %v1606
      %1625 = vmatpush1.bf16.msra.mxu0 %v1603
      %1626 = vmatprep.subr.bf16.mxu0 %v1584
      %1627 = vmatpush1.bf16.msra.mxu0 %v1583
      %1628 = vmatprep.subr.bf16.mxu0 %v1580
      %1629 = vmatpush1.bf16.msra.mxu0 %v1579
      %1630 = vmatprep.subr.bf16.mxu0 0
      %1631 = vmatpush2.bf16.msra.mxu0 0
      %1632 = vmatprep.subr.bf16.mxu0 0
      %1633 = vmatpush2.bf16.msra.mxu0 0
      %1634 = vmatprep.subr.bf16.mxu0 0
      %1635 = vmatpush2.bf16.msra.mxu0 0
      %1636 = vmatprep.subr.bf16.mxu0 0
      %1637 = vmatpush2.bf16.msra.mxu0 0
      %1638 = vmatprep.subr.bf16.mxu0 0
      %1639 = vmatpush2.bf16.msra.mxu0 0
      %1640 = vmatprep.subr.bf16.mxu0 0
      %1641 = vmatpush2.bf16.msra.mxu0 0
      %1642 = vmatprep.subr.bf16.mxu0 0
      %1643 = vmatpush2.bf16.msra.mxu0 0
      %1644 = vmatprep.subr.bf16.mxu0 0
      %1645 = vmatpush2.bf16.msra.mxu0 0
      %1646 = vmatprep.mubr.bf16.mxu0 0
      %1647 = vmatmul.mubr.bf16.gmra.mxu0 %v1600
      %v1648 = vpop.f32.mrf.mxu0
      %v1649 = vadd.f32 0.0, %v1648
      %v1650 = vpop.f32.mrf.mxu0
      %v1651 = vadd.f32 0.0, %v1650
      %v1652 = vpop.f32.mrf.mxu0
      %v1653 = vadd.f32 0.0, %v1652
      %v1654 = vpop.f32.mrf.mxu0
      %v1655 = vadd.f32 0.0, %v1654
      %1656 = vdwg.mxu0
      %1657 = vmatprep.subr.bf16.mxu0 0
      %1658 = vmatpush1.bf16.msra.mxu0 0
      %1659 = vmatprep.subr.bf16.mxu0 0
      %1660 = vmatpush1.bf16.msra.mxu0 0
      %1661 = vmatprep.subr.bf16.mxu0 0
      %1662 = vmatpush1.bf16.msra.mxu0 0
      %1663 = vmatprep.subr.bf16.mxu0 0
      %1664 = vmatpush1.bf16.msra.mxu0 0
      %1665 = vmatprep.subr.bf16.mxu0 0
      %1666 = vmatpush1.bf16.msra.mxu0 0
      %1667 = vmatprep.subr.bf16.mxu0 %v1612
      %1668 = vmatpush1.bf16.msra.mxu0 %v1609
      %1669 = vmatprep.subr.bf16.mxu0 %v1586
      %1670 = vmatpush1.bf16.msra.mxu0 %v1585
      %1671 = vmatprep.subr.bf16.mxu0 %v1582
      %1672 = vmatpush1.bf16.msra.mxu0 %v1581
      %1673 = vmatprep.subr.bf16.mxu0 0
      %1674 = vmatpush2.bf16.msra.mxu0 0
      %1675 = vmatprep.subr.bf16.mxu0 0
      %1676 = vmatpush2.bf16.msra.mxu0 0
      %1677 = vmatprep.subr.bf16.mxu0 0
      %1678 = vmatpush2.bf16.msra.mxu0 0
      %1679 = vmatprep.subr.bf16.mxu0 0
      %1680 = vmatpush2.bf16.msra.mxu0 0
      %1681 = vmatprep.subr.bf16.mxu0 0
      %1682 = vmatpush2.bf16.msra.mxu0 0
      %1683 = vmatprep.subr.bf16.mxu0 0
      %1684 = vmatpush2.bf16.msra.mxu0 0
      %1685 = vmatprep.subr.bf16.mxu0 0
      %1686 = vmatpush2.bf16.msra.mxu0 0
      %1687 = vmatprep.subr.bf16.mxu0 0
      %1688 = vmatpush2.bf16.msra.mxu0 0
      %1689 = vmatprep.mubr.bf16.mxu0 0
      %1690 = vmatmul.mubr.bf16.gmra.mxu0 %v1600
      %v1691 = vpop.f32.mrf.mxu0
      %v1692 = vadd.f32 0.0, %v1691
      %v1693 = vpop.f32.mrf.mxu0
      %v1694 = vadd.f32 0.0, %v1693
      %v1695 = vpop.f32.mrf.mxu0
      %v1696 = vadd.f32 0.0, %v1695
      %v1697 = vpop.f32.mrf.mxu0
      %v1698 = vadd.f32 0.0, %v1697
      %1699 = vdwg.mxu0
      %v1700 = vadd.f32 %v1490, %v1649
      %v1701 = vadd.f32 %v1492, %v1651
      %v1702 = vadd.f32 %v1533, %v1692
      %v1703 = vadd.f32 %v1535, %v1694
      %v1704 = vadd.f32 %v1494, %v1653
      %v1705 = vadd.f32 %v1496, %v1655
      %v1706 = vadd.f32 %v1537, %v1696
      %v1707 = vadd.f32 %v1539, %v1698
      %s1708 = scalar_lea.vmem %s5, 24
      %v1709 = vld [vmem:[%s1708] sm:$0xf]
      %v1710 = vld [vmem:[%s1708 + $0x4] sm:$0xf]
      %v1713 = vunpack.c.l.b16 %v1709
      %v1714 = vunpack.c.l.b16 %v1710
      %v1715 = vpack.c.b16 %v1714, %v1713
      %1716 = vrot.lane.b32.xlu0 %v1227, 32
      %v1717 = vpop.permute.xlu0 %1716
      %1718 = vrot.lane.b32.xlu0 %v1231, 32
      %v1719 = vpop.permute.xlu0 %1718
      %1720 = vrot.lane.b32.xlu0 %v1235, 32
      %v1721 = vpop.permute.xlu0 %1720
      %1722 = vrot.lane.b32.xlu0 %v1239, 32
      %v1723 = vpop.permute.xlu0 %1722
      %1724 = vrot.lane.b32.xlu0 %v1261, 32
      %v1725 = vpop.permute.xlu0 %1724
      %1726 = vrot.lane.b32.xlu0 %v1243, 32
      %v1727 = vpop.permute.xlu0 %1726
      %1728 = vrot.lane.b32.xlu0 %v1247, 32
      %v1729 = vpop.permute.xlu0 %1728
      %1730 = vrot.lane.b32.xlu0 %v1251, 32
      %v1731 = vpop.permute.xlu0 %1730
      %1732 = vrot.lane.b32.xlu0 %v1255, 32
      %v1733 = vpop.permute.xlu0 %1732
      %1734 = vrot.lane.b32.xlu0 %v1264, 32
      %v1735 = vpop.permute.xlu0 %1734
      %1736 = vrot.lane.b32.xlu0 %v1221, 32
      %v1737 = vpop.permute.xlu0 %1736
      %1738 = vrot.lane.b32.xlu0 %v1222, 32
      %v1739 = vpop.permute.xlu0 %1738
      %1740 = vrot.lane.b32.xlu0 %v1223, 32
      %v1741 = vpop.permute.xlu0 %1740
      %1742 = vrot.lane.b32.xlu0 %v1224, 32
      %v1743 = vpop.permute.xlu0 %1742
      %1744 = vrot.lane.b32.xlu0 %v1219, 32
      %v1745 = vpop.permute.xlu0 %1744
      %vm1746 = vcmask 261120
      %v1747 = vsel %vm1746, %v1717, %v1719
      %v1748 = vsel %vm1746, %v1719, %v1721
      %v1749 = vsel %vm1746, %v1721, %v1723
      %v1750 = vsel %vm1746, %v1723, %v1725
      %v1751 = vsel %vm1746, %v1727, %v1729
      %v1752 = vsel %vm1746, %v1729, %v1731
      %v1753 = vsel %vm1746, %v1731, %v1733
      %v1754 = vsel %vm1746, %v1733, %v1735
      %v1755 = vsel %vm1746, %v1737, %v1739
      %v1756 = vsel %vm1746, %v1739, %v1741
      %v1757 = vsel %vm1746, %v1741, %v1743
      %v1758 = vsel %vm1746, %v1743, %v1745
      %v1768 = vsel %vm1333, %v1715, 0
      %v1771 = vsel %vm502, %v1755, 0
      %v1774 = vsel %vm502, %v1756, 0
      %v1777 = vsel %vm502, %v1757, 0
      %v1780 = vsel %vm502, %v1758, 0
      %1782 = vmatprep.subr.bf16.mxu0 0
      %1783 = vmatpush1.bf16.msra.mxu0 0
      %1784 = vmatprep.subr.bf16.mxu0 0
      %1785 = vmatpush1.bf16.msra.mxu0 0
      %1786 = vmatprep.subr.bf16.mxu0 0
      %1787 = vmatpush1.bf16.msra.mxu0 0
      %1788 = vmatprep.subr.bf16.mxu0 0
      %1789 = vmatpush1.bf16.msra.mxu0 0
      %1790 = vmatprep.subr.bf16.mxu0 0
      %1791 = vmatpush1.bf16.msra.mxu0 0
      %1792 = vmatprep.subr.bf16.mxu0 %v1774
      %1793 = vmatpush1.bf16.msra.mxu0 %v1771
      %1794 = vmatprep.subr.bf16.mxu0 %v1752
      %1795 = vmatpush1.bf16.msra.mxu0 %v1751
      %1796 = vmatprep.subr.bf16.mxu0 %v1748
      %1797 = vmatpush1.bf16.msra.mxu0 %v1747
      %1798 = vmatprep.subr.bf16.mxu0 0
      %1799 = vmatpush2.bf16.msra.mxu0 0
      %1800 = vmatprep.subr.bf16.mxu0 0
      %1801 = vmatpush2.bf16.msra.mxu0 0
      %1802 = vmatprep.subr.bf16.mxu0 0
      %1803 = vmatpush2.bf16.msra.mxu0 0
      %1804 = vmatprep.subr.bf16.mxu0 0
      %1805 = vmatpush2.bf16.msra.mxu0 0
      %1806 = vmatprep.subr.bf16.mxu0 0
      %1807 = vmatpush2.bf16.msra.mxu0 0
      %1808 = vmatprep.subr.bf16.mxu0 0
      %1809 = vmatpush2.bf16.msra.mxu0 0
      %1810 = vmatprep.subr.bf16.mxu0 0
      %1811 = vmatpush2.bf16.msra.mxu0 0
      %1812 = vmatprep.subr.bf16.mxu0 0
      %1813 = vmatpush2.bf16.msra.mxu0 0
      %1814 = vmatprep.mubr.bf16.mxu0 0
      %1815 = vmatmul.mubr.bf16.gmra.mxu0 %v1768
      %v1816 = vpop.f32.mrf.mxu0
      %v1817 = vadd.f32 0.0, %v1816
      %v1818 = vpop.f32.mrf.mxu0
      %v1819 = vadd.f32 0.0, %v1818
      %v1820 = vpop.f32.mrf.mxu0
      %v1821 = vadd.f32 0.0, %v1820
      %v1822 = vpop.f32.mrf.mxu0
      %v1823 = vadd.f32 0.0, %v1822
      %1824 = vdwg.mxu0
      %1825 = vmatprep.subr.bf16.mxu0 0
      %1826 = vmatpush1.bf16.msra.mxu0 0
      %1827 = vmatprep.subr.bf16.mxu0 0
      %1828 = vmatpush1.bf16.msra.mxu0 0
      %1829 = vmatprep.subr.bf16.mxu0 0
      %1830 = vmatpush1.bf16.msra.mxu0 0
      %1831 = vmatprep.subr.bf16.mxu0 0
      %1832 = vmatpush1.bf16.msra.mxu0 0
      %1833 = vmatprep.subr.bf16.mxu0 0
      %1834 = vmatpush1.bf16.msra.mxu0 0
      %1835 = vmatprep.subr.bf16.mxu0 %v1780
      %1836 = vmatpush1.bf16.msra.mxu0 %v1777
      %1837 = vmatprep.subr.bf16.mxu0 %v1754
      %1838 = vmatpush1.bf16.msra.mxu0 %v1753
      %1839 = vmatprep.subr.bf16.mxu0 %v1750
      %1840 = vmatpush1.bf16.msra.mxu0 %v1749
      %1841 = vmatprep.subr.bf16.mxu0 0
      %1842 = vmatpush2.bf16.msra.mxu0 0
      %1843 = vmatprep.subr.bf16.mxu0 0
      %1844 = vmatpush2.bf16.msra.mxu0 0
      %1845 = vmatprep.subr.bf16.mxu0 0
      %1846 = vmatpush2.bf16.msra.mxu0 0
      %1847 = vmatprep.subr.bf16.mxu0 0
      %1848 = vmatpush2.bf16.msra.mxu0 0
      %1849 = vmatprep.subr.bf16.mxu0 0
      %1850 = vmatpush2.bf16.msra.mxu0 0
      %1851 = vmatprep.subr.bf16.mxu0 0
      %1852 = vmatpush2.bf16.msra.mxu0 0
      %1853 = vmatprep.subr.bf16.mxu0 0
      %1854 = vmatpush2.bf16.msra.mxu0 0
      %1855 = vmatprep.subr.bf16.mxu0 0
      %1856 = vmatpush2.bf16.msra.mxu0 0
      %1857 = vmatprep.mubr.bf16.mxu0 0
      %1858 = vmatmul.mubr.bf16.gmra.mxu0 %v1768
      %v1859 = vpop.f32.mrf.mxu0
      %v1860 = vadd.f32 0.0, %v1859
      %v1861 = vpop.f32.mrf.mxu0
      %v1862 = vadd.f32 0.0, %v1861
      %v1863 = vpop.f32.mrf.mxu0
      %v1864 = vadd.f32 0.0, %v1863
      %v1865 = vpop.f32.mrf.mxu0
      %v1866 = vadd.f32 0.0, %v1865
      %1867 = vdwg.mxu0
      %v1868 = vadd.f32 %v1700, %v1817
      %v1869 = vadd.f32 %v1701, %v1819
      %v1870 = vadd.f32 %v1702, %v1860
      %v1871 = vadd.f32 %v1703, %v1862
      %v1872 = vadd.f32 %v1704, %v1821
      %v1873 = vadd.f32 %v1705, %v1823
      %v1874 = vadd.f32 %v1706, %v1864
      %v1875 = vadd.f32 %v1707, %v1866
      %v1877 = vrot.slane %v1156, 4
      %1878 = vrot.lane.b32.xlu0 %v1877, 127
      %v1879 = vpop.permute.xlu0 %1878
      %v1880 = vsel %vm740, %v1176, %v1879
      %1881 = vrot.lane.b32.xlu0 %v1156, 126
      %v1882 = vpop.permute.xlu0 %1881
      %v1883 = vsel %vm755, %v1190, %v1882
      %1884 = vrot.lane.b32.xlu0 %v1877, 125
      %v1885 = vpop.permute.xlu0 %1884
      %v1886 = vsel %vm1205, %v1204, %v1885
      %1887 = vrot.lane.b32.xlu0 %v1156, 124
      %v1888 = vpop.permute.xlu0 %1887
      %v1889 = vsel %vm1220, %v1219, %v1888
      %v1891 = vsel %vm502, %v1155, %v1880
      %v1895 = vsel %vm502, %v1883, %v1886
      %s1897 = scalar_lea.vmem %s5, 32
      %v1898 = vld [vmem:[%s1897] sm:$0xf]
      %v1899 = vld [vmem:[%s1897 + $0x4] sm:$0xf]
      %v1902 = vunpack.c.l.b16 %v1898
      %v1903 = vunpack.c.l.b16 %v1899
      %v1904 = vpack.c.b16 %v1903, %v1902
      %v1906 = vsel %vm1333, %v1904, 0
      %v1909 = vsel %vm502, %v1889, 0
      %1911 = vmatprep.subr.bf16.mxu0 0
      %1912 = vmatpush1.bf16.msra.mxu0 0
      %1913 = vmatprep.subr.bf16.mxu0 0
      %1914 = vmatpush1.bf16.msra.mxu0 0
      %1915 = vmatprep.subr.bf16.mxu0 0
      %1916 = vmatpush1.bf16.msra.mxu0 0
      %1917 = vmatprep.subr.bf16.mxu0 0
      %1918 = vmatpush1.bf16.msra.mxu0 0
      %1919 = vmatprep.subr.bf16.mxu0 0
      %1920 = vmatpush1.bf16.msra.mxu0 0
      %1921 = vmatprep.subr.bf16.mxu0 %v1450
      %1922 = vmatpush1.bf16.msra.mxu0 %v1447
      %1923 = vmatprep.subr.bf16.mxu0 %v1251
      %1924 = vmatpush1.bf16.msra.mxu0 %v1247
      %1925 = vmatprep.subr.bf16.mxu0 %v1235
      %1926 = vmatpush1.bf16.msra.mxu0 %v1231
      %1927 = vmatprep.subr.bf16.mxu0 0
      %1928 = vmatpush2.bf16.msra.mxu0 0
      %1929 = vmatprep.subr.bf16.mxu0 0
      %1930 = vmatpush2.bf16.msra.mxu0 0
      %1931 = vmatprep.subr.bf16.mxu0 0
      %1932 = vmatpush2.bf16.msra.mxu0 0
      %1933 = vmatprep.subr.bf16.mxu0 0
      %1934 = vmatpush2.bf16.msra.mxu0 0
      %1935 = vmatprep.subr.bf16.mxu0 0
      %1936 = vmatpush2.bf16.msra.mxu0 0
      %1937 = vmatprep.subr.bf16.mxu0 0
      %1938 = vmatpush2.bf16.msra.mxu0 0
      %1939 = vmatprep.subr.bf16.mxu0 0
      %1940 = vmatpush2.bf16.msra.mxu0 0
      %1941 = vmatprep.subr.bf16.mxu0 0
      %1942 = vmatpush2.bf16.msra.mxu0 0
      %1943 = vmatprep.mubr.bf16.mxu0 0
      %1944 = vmatmul.mubr.bf16.gmra.mxu0 %v1906
      %v1945 = vpop.f32.mrf.mxu0
      %v1946 = vadd.f32 0.0, %v1945
      %v1947 = vpop.f32.mrf.mxu0
      %v1948 = vadd.f32 0.0, %v1947
      %v1949 = vpop.f32.mrf.mxu0
      %v1950 = vadd.f32 0.0, %v1949
      %v1951 = vpop.f32.mrf.mxu0
      %v1952 = vadd.f32 0.0, %v1951
      %1953 = vdwg.mxu0
      %1954 = vmatprep.subr.bf16.mxu0 0
      %1955 = vmatpush1.bf16.msra.mxu0 0
      %1956 = vmatprep.subr.bf16.mxu0 0
      %1957 = vmatpush1.bf16.msra.mxu0 0
      %1958 = vmatprep.subr.bf16.mxu0 0
      %1959 = vmatpush1.bf16.msra.mxu0 0
      %1960 = vmatprep.subr.bf16.mxu0 0
      %1961 = vmatpush1.bf16.msra.mxu0 0
      %1962 = vmatprep.subr.bf16.mxu0 0
      %1963 = vmatpush1.bf16.msra.mxu0 0
      %1964 = vmatprep.subr.bf16.mxu0 %v1909
      %1965 = vmatpush1.bf16.msra.mxu0 %v1453
      %1966 = vmatprep.subr.bf16.mxu0 %v1895
      %1967 = vmatpush1.bf16.msra.mxu0 %v1255
      %1968 = vmatprep.subr.bf16.mxu0 %v1891
      %1969 = vmatpush1.bf16.msra.mxu0 %v1239
      %1970 = vmatprep.subr.bf16.mxu0 0
      %1971 = vmatpush2.bf16.msra.mxu0 0
      %1972 = vmatprep.subr.bf16.mxu0 0
      %1973 = vmatpush2.bf16.msra.mxu0 0
      %1974 = vmatprep.subr.bf16.mxu0 0
      %1975 = vmatpush2.bf16.msra.mxu0 0
      %1976 = vmatprep.subr.bf16.mxu0 0
      %1977 = vmatpush2.bf16.msra.mxu0 0
      %1978 = vmatprep.subr.bf16.mxu0 0
      %1979 = vmatpush2.bf16.msra.mxu0 0
      %1980 = vmatprep.subr.bf16.mxu0 0
      %1981 = vmatpush2.bf16.msra.mxu0 0
      %1982 = vmatprep.subr.bf16.mxu0 0
      %1983 = vmatpush2.bf16.msra.mxu0 0
      %1984 = vmatprep.subr.bf16.mxu0 0
      %1985 = vmatpush2.bf16.msra.mxu0 0
      %1986 = vmatprep.mubr.bf16.mxu0 0
      %1987 = vmatmul.mubr.bf16.gmra.mxu0 %v1906
      %v1988 = vpop.f32.mrf.mxu0
      %v1989 = vadd.f32 0.0, %v1988
      %v1990 = vpop.f32.mrf.mxu0
      %v1991 = vadd.f32 0.0, %v1990
      %v1992 = vpop.f32.mrf.mxu0
      %v1993 = vadd.f32 0.0, %v1992
      %v1994 = vpop.f32.mrf.mxu0
      %v1995 = vadd.f32 0.0, %v1994
      %1996 = vdwg.mxu0
      %v1997 = vadd.f32 %v1868, %v1946
      %v1998 = vadd.f32 %v1869, %v1948
      %v1999 = vadd.f32 %v1870, %v1989
      %v2000 = vadd.f32 %v1871, %v1991
      %v2001 = vadd.f32 %v1872, %v1950
      %v2002 = vadd.f32 %v1873, %v1952
      %v2003 = vadd.f32 %v1874, %v1993
      %v2004 = vadd.f32 %v1875, %v1995
      %v2005 = vld [vmem:[%s6] sm:$0xff]
      %v2006 = vld [vmem:[%s6 + $0x8] sm:$0xff]
      %2008 = vset.pattern.permute.xlu0 0
      %2009 = vperm.xlu0 %2008, %v2005
      %v2010 = vpop.permute.xlu0 %2009
      %2013 = vset.pattern.permute.xlu0 0
      %2014 = vperm.xlu0 %2013, %v2006
      %v2015 = vpop.permute.xlu0 %2014
      %v2017 = vadd.f32 %v1997, %v2010
      %v2018 = vadd.f32 %v1998, %v2010
      %v2019 = vadd.f32 %v1999, %v2010
      %v2020 = vadd.f32 %v2000, %v2010
      %v2021 = vadd.f32 %v2001, %v2015
      %v2022 = vadd.f32 %v2002, %v2015
      %v2023 = vadd.f32 %v2003, %v2015
      %v2024 = vadd.f32 %v2004, %v2015
      %v2025 = vmax.f32 %v2017, 0.0
      %v2026 = vmax.f32 %v2018, 0.0
      %v2027 = vmax.f32 %v2019, 0.0
      %v2028 = vmax.f32 %v2020, 0.0
      %v2029 = vmax.f32 %v2021, 0.0
      %v2030 = vmax.f32 %v2022, 0.0
      %v2031 = vmax.f32 %v2023, 0.0
      %v2032 = vmax.f32 %v2024, 0.0
      %vm2033 = vmpackc.low %vm705, %vm704
      %vm2034 = vmpackc.low %vm707, %vm706
      %vm2035 = vmpackc.low %vm709, %vm708
      %v2036 = vsel %vm2033, %v364, 4286644096
      %v2037 = vsel %vm2034, %v365, 4286644096
      %v2038 = vsel %vm2035, %v366, 4286644096
      %2042 = vrot.lane.b32.xlu0 %v2036, 127
      %v2043 = vpop.permute.xlu0 %2042
      %2044 = vrot.lane.b32.xlu0 %v2037, 127
      %v2045 = vpop.permute.xlu0 %2044
      %2046 = vrot.lane.b32.xlu0 %v2038, 127
      %v2047 = vpop.permute.xlu0 %2046
      %v2048 = vrot.slane %v2043, 4
      %v2049 = vrot.slane %v2045, 4
      %v2050 = vrot.slane %v2047, 4
      %vm2051 = vcmask 1043456
      %v2052 = vsel %vm2051, %v2048, %v2049
      %v2053 = vsel %vm740, %v2043, %v2052
      %v2054 = vsel %vm2051, %v2049, %v2050
      %v2055 = vsel %vm740, %v2045, %v2054
      %v2056 = vsel %vm740, %v2047, %v2050
      %v2060 = vmax.bf16 %v2036, %v2053
      %v2061 = vmax.bf16 %v2037, %v2055
      %v2062 = vmax.bf16 %v2038, %v2056
      %2063 = vrot.lane.b32.xlu0 %v2036, 126
      %v2064 = vpop.permute.xlu0 %2063
      %2065 = vrot.lane.b32.xlu0 %v2037, 126
      %v2066 = vpop.permute.xlu0 %2065
      %2067 = vrot.lane.b32.xlu0 %v2038, 126
      %v2068 = vpop.permute.xlu0 %2067
      %v2069 = vrot.slane %v2064, 4
      %v2070 = vrot.slane %v2066, 4
      %v2071 = vrot.slane %v2068, 4
      %v2072 = vsel %vm2051, %v2069, %v2070
      %v2073 = vsel %vm755, %v2064, %v2072
      %v2074 = vsel %vm2051, %v2070, %v2071
      %v2075 = vsel %vm755, %v2066, %v2074
      %v2076 = vsel %vm755, %v2068, %v2071
      %v2080 = vmax.bf16 %v2060, %v2073
      %v2081 = vmax.bf16 %v2061, %v2075
      %v2082 = vmax.bf16 %v2062, %v2076
      %2086 = vrot.lane.b32.xlu0 %v2080, 96
      %v2087 = vpop.permute.xlu0 %2086
      %2088 = vrot.lane.b32.xlu0 %v2081, 96
      %v2089 = vpop.permute.xlu0 %2088
      %2090 = vrot.lane.b32.xlu0 %v2082, 96
      %v2091 = vpop.permute.xlu0 %2090
      %v2092 = vrot.slane %v2087, 4
      %v2093 = vrot.slane %v2089, 4
      %v2094 = vrot.slane %v2091, 4
      %v2095 = vsel %vm2051, %v2092, %v2093
      %v2096 = vsel %vm770, %v2087, %v2095
      %v2097 = vsel %vm2051, %v2093, %v2094
      %v2098 = vsel %vm770, %v2089, %v2097
      %v2102 = vmax.bf16 %v2080, %v2096
      %v2103 = vmax.bf16 %v2081, %v2098
      %v2104 = vmax.bf16 %v2082, %v2091
      %2105 = vrot.lane.b32.xlu0 %v2080, 64
      %v2106 = vpop.permute.xlu0 %2105
      %2107 = vrot.lane.b32.xlu0 %v2081, 64
      %v2108 = vpop.permute.xlu0 %2107
      %2109 = vrot.lane.b32.xlu0 %v2082, 64
      %v2110 = vpop.permute.xlu0 %2109
      %v2111 = vrot.slane %v2106, 4
      %v2112 = vrot.slane %v2108, 4
      %v2113 = vrot.slane %v2110, 4
      %v2114 = vsel %vm2051, %v2111, %v2112
      %v2115 = vsel %vm815, %v2106, %v2114
      %v2116 = vsel %vm2051, %v2112, %v2113
      %v2117 = vsel %vm815, %v2108, %v2116
      %v2121 = vmax.bf16 %v2102, %v2115
      %v2122 = vmax.bf16 %v2103, %v2117
      %v2123 = vmax.bf16 %v2104, %v2110
      %v2124 = vld [vmem:[%s7] sm:$0xf]
      %v2125 = vld [vmem:[%s7 + $0x4] sm:$0xf]
      %v2126 = vld [vmem:[%s8] sm:$0xff]
      %v2127 = vld [vmem:[%s8 + $0x8] sm:$0xff]
      %2129 = vset.pattern.permute.xlu0 0
      %2130 = vperm.xlu0 %2129, %v2126
      %v2131 = vpop.permute.xlu0 %2130
      %2134 = vset.pattern.permute.xlu0 0
      %2135 = vperm.xlu0 %2134, %v2127
      %v2136 = vpop.permute.xlu0 %2135
      %v2140 = vunpack.c.l.b16 %v2124
      %v2141 = vunpack.c.l.b16 %v2125
      %v2142 = vpack.c.b16 %v2141, %v2140
      %v2146 = vunpack.c.l.b16 %v2121
      %v2147 = vunpack.c.h.b16 %v2121
      %v2148 = vunpack.c.l.b16 %v2122
      %v2149 = vunpack.c.h.b16 %v2122
      %v2150 = vunpack.c.l.b16 %v2123
      %v2151 = vpack.c.b16 %v2146, %v2146
      %v2152 = vpack.c.b16 %v2147, %v2147
      %v2153 = vpack.c.b16 %v2148, %v2148
      %v2154 = vpack.c.b16 %v2149, %v2149
      %v2155 = vpack.c.b16 %v2150, %v2150
      %2156 = vrot.lane.b32.xlu0 %v2151, 95
      %v2157 = vpop.permute.xlu0 %2156
      %2158 = vrot.lane.b32.xlu0 %v2152, 95
      %v2159 = vpop.permute.xlu0 %2158
      %2160 = vrot.lane.b32.xlu0 %v2153, 95
      %v2161 = vpop.permute.xlu0 %2160
      %2162 = vrot.lane.b32.xlu0 %v2154, 95
      %v2163 = vpop.permute.xlu0 %2162
      %2164 = vrot.lane.b32.xlu0 %v2155, 95
      %v2165 = vpop.permute.xlu0 %2164
      %v2166 = vsel %vm785, %v2157, %v2159
      %v2167 = vsel %vm785, %v2159, %v2161
      %v2168 = vsel %vm785, %v2161, %v2163
      %v2169 = vsel %vm785, %v2163, %v2165
      %v2171 = vsel %vm495, %v2142, 0
      %v2174 = vsel %vm502, %v2166, 0
      %v2177 = vsel %vm502, %v2167, 0
      %v2180 = vsel %vm502, %v2168, 0
      %v2183 = vsel %vm502, %v2169, 0
      %2185 = vmatprep.subr.bf16.mxu0 0
      %2186 = vmatpush1.bf16.msra.mxu0 0
      %2187 = vmatprep.subr.bf16.mxu0 0
      %2188 = vmatpush1.bf16.msra.mxu0 0
      %2189 = vmatprep.subr.bf16.mxu0 0
      %2190 = vmatpush1.bf16.msra.mxu0 0
      %2191 = vmatprep.subr.bf16.mxu0 0
      %2192 = vmatpush1.bf16.msra.mxu0 0
      %2193 = vmatprep.subr.bf16.mxu0 0
      %2194 = vmatpush1.bf16.msra.mxu0 0
      %2195 = vmatprep.subr.bf16.mxu0 0
      %2196 = vmatpush1.bf16.msra.mxu0 0
      %2197 = vmatprep.subr.bf16.mxu0 0
      %2198 = vmatpush1.bf16.msra.mxu0 0
      %2199 = vmatprep.subr.bf16.mxu0 %v2177
      %2200 = vmatpush1.bf16.msra.mxu0 %v2174
      %2201 = vmatprep.subr.bf16.mxu0 0
      %2202 = vmatpush2.bf16.msra.mxu0 0
      %2203 = vmatprep.subr.bf16.mxu0 0
      %2204 = vmatpush2.bf16.msra.mxu0 0
      %2205 = vmatprep.subr.bf16.mxu0 0
      %2206 = vmatpush2.bf16.msra.mxu0 0
      %2207 = vmatprep.subr.bf16.mxu0 0
      %2208 = vmatpush2.bf16.msra.mxu0 0
      %2209 = vmatprep.subr.bf16.mxu0 0
      %2210 = vmatpush2.bf16.msra.mxu0 0
      %2211 = vmatprep.subr.bf16.mxu0 0
      %2212 = vmatpush2.bf16.msra.mxu0 0
      %2213 = vmatprep.subr.bf16.mxu0 0
      %2214 = vmatpush2.bf16.msra.mxu0 0
      %2215 = vmatprep.subr.bf16.mxu0 0
      %2216 = vmatpush2.bf16.msra.mxu0 0
      %2217 = vmatprep.mubr.bf16.mxu0 0
      %2218 = vmatmul.mubr.bf16.gmra.mxu0 %v2171
      %v2219 = vpop.f32.mrf.mxu0
      %v2220 = vadd.f32 %v2131, %v2219
      %v2221 = vpop.f32.mrf.mxu0
      %v2222 = vadd.f32 %v2131, %v2221
      %v2223 = vpop.f32.mrf.mxu0
      %v2224 = vadd.f32 %v2136, %v2223
      %v2225 = vpop.f32.mrf.mxu0
      %v2226 = vadd.f32 %v2136, %v2225
      %2227 = vdwg.mxu0
      %2228 = vmatprep.subr.bf16.mxu0 0
      %2229 = vmatpush1.bf16.msra.mxu0 0
      %2230 = vmatprep.subr.bf16.mxu0 0
      %2231 = vmatpush1.bf16.msra.mxu0 0
      %2232 = vmatprep.subr.bf16.mxu0 0
      %2233 = vmatpush1.bf16.msra.mxu0 0
      %2234 = vmatprep.subr.bf16.mxu0 0
      %2235 = vmatpush1.bf16.msra.mxu0 0
      %2236 = vmatprep.subr.bf16.mxu0 0
      %2237 = vmatpush1.bf16.msra.mxu0 0
      %2238 = vmatprep.subr.bf16.mxu0 0
      %2239 = vmatpush1.bf16.msra.mxu0 0
      %2240 = vmatprep.subr.bf16.mxu0 0
      %2241 = vmatpush1.bf16.msra.mxu0 0
      %2242 = vmatprep.subr.bf16.mxu0 %v2183
      %2243 = vmatpush1.bf16.msra.mxu0 %v2180
      %2244 = vmatprep.subr.bf16.mxu0 0
      %2245 = vmatpush2.bf16.msra.mxu0 0
      %2246 = vmatprep.subr.bf16.mxu0 0
      %2247 = vmatpush2.bf16.msra.mxu0 0
      %2248 = vmatprep.subr.bf16.mxu0 0
      %2249 = vmatpush2.bf16.msra.mxu0 0
      %2250 = vmatprep.subr.bf16.mxu0 0
      %2251 = vmatpush2.bf16.msra.mxu0 0
      %2252 = vmatprep.subr.bf16.mxu0 0
      %2253 = vmatpush2.bf16.msra.mxu0 0
      %2254 = vmatprep.subr.bf16.mxu0 0
      %2255 = vmatpush2.bf16.msra.mxu0 0
      %2256 = vmatprep.subr.bf16.mxu0 0
      %2257 = vmatpush2.bf16.msra.mxu0 0
      %2258 = vmatprep.subr.bf16.mxu0 0
      %2259 = vmatpush2.bf16.msra.mxu0 0
      %2260 = vmatprep.mubr.bf16.mxu0 0
      %2261 = vmatmul.mubr.bf16.gmra.mxu0 %v2171
      %v2262 = vpop.f32.mrf.mxu0
      %v2263 = vadd.f32 %v2131, %v2262
      %v2264 = vpop.f32.mrf.mxu0
      %v2265 = vadd.f32 %v2131, %v2264
      %v2266 = vpop.f32.mrf.mxu0
      %v2267 = vadd.f32 %v2136, %v2266
      %v2268 = vpop.f32.mrf.mxu0
      %v2269 = vadd.f32 %v2136, %v2268
      %2270 = vdwg.mxu0
      %v2271 = vmax.f32 %v2220, 0.0
      %v2272 = vmax.f32 %v2222, 0.0
      %v2273 = vmax.f32 %v2263, 0.0
      %v2274 = vmax.f32 %v2265, 0.0
      %v2275 = vmax.f32 %v2224, 0.0
      %v2276 = vmax.f32 %v2226, 0.0
      %v2277 = vmax.f32 %v2267, 0.0
      %v2278 = vmax.f32 %v2269, 0.0
      %v2279 = vpack.c.bf16 %v682, %v677
      %v2280 = vpack.c.bf16 %v683, %v678
      %v2281 = vpack.c.bf16 %v684, %v679
      %v2282 = vpack.c.bf16 %v685, %v680
      %v2283 = vpack.c.bf16 %v686, %v681
      %v2289 = vunpack.c.l.b16 %v2279
      %v2290 = vunpack.c.l.b16 %v2280
      %v2291 = vunpack.c.l.b16 %v2281
      %v2292 = vunpack.c.l.b16 %v2282
      %v2293 = vunpack.c.l.b16 %v2283
      %v2294 = vunpack.c.h.b16 %v2279
      %v2295 = vunpack.c.h.b16 %v2280
      %v2296 = vunpack.c.h.b16 %v2281
      %v2297 = vunpack.c.h.b16 %v2282
      %v2298 = vunpack.c.h.b16 %v2283
      %v2299 = vpack.c.b16 %v2290, %v2289
      %v2300 = vpack.c.b16 %v2292, %v2291
      %v2301 = vpack.c.b16 %v2293, %v2293
      %v2302 = vpack.c.b16 %v2295, %v2294
      %v2303 = vpack.c.b16 %v2297, %v2296
      %v2304 = vpack.c.b16 %v2298, %v2298
      %2305 = vrot.lane.b32.xlu0 %v2299, 62
      %v2306 = vpop.permute.xlu0 %2305
      %2307 = vrot.lane.b32.xlu0 %v2300, 62
      %v2308 = vpop.permute.xlu0 %2307
      %2309 = vrot.lane.b32.xlu0 %v2301, 62
      %v2310 = vpop.permute.xlu0 %2309
      %2311 = vrot.lane.b32.xlu0 %v2302, 62
      %v2312 = vpop.permute.xlu0 %2311
      %2313 = vrot.lane.b32.xlu0 %v2303, 62
      %v2314 = vpop.permute.xlu0 %2313
      %2315 = vrot.lane.b32.xlu0 %v2304, 62
      %v2316 = vpop.permute.xlu0 %2315
      %v2317 = vrot.slane %v2306, 4
      %v2318 = vrot.slane %v2308, 4
      %v2319 = vrot.slane %v2310, 4
      %v2320 = vrot.slane %v2312, 4
      %v2321 = vrot.slane %v2314, 4
      %v2322 = vrot.slane %v2316, 4
      %v2323 = vsel %vm2051, %v2317, %v2318
      %v2324 = vsel %vm845, %v2306, %v2323
      %v2325 = vsel %vm2051, %v2318, %v2319
      %v2326 = vsel %vm845, %v2308, %v2325
      %v2327 = vsel %vm2051, %v2320, %v2321
      %v2328 = vsel %vm845, %v2312, %v2327
      %v2329 = vsel %vm2051, %v2321, %v2322
      %v2330 = vsel %vm845, %v2314, %v2329
      %2335 = vst [vmem:[%s354] sm:$0xff] %v2324
      %2336 = vst [vmem:[%s354 + $0x8] sm:$0xff] %v2326
      %2337 = vst [vmem:[%s354 + $0x10] sm:$0xff] %v2328
      %2338 = vst [vmem:[%s354 + $0x18] sm:$0xff] %v2330
      %v2339 = vpack.c.bf16 %v1141, %v1137
      %v2340 = vpack.c.bf16 %v1142, %v1138
      %v2341 = vpack.c.bf16 %v1143, %v1139
      %v2342 = vpack.c.bf16 %v1144, %v1140
      %v2347 = vunpack.c.l.b16 %v2339
      %v2348 = vunpack.c.l.b16 %v2340
      %v2349 = vunpack.c.l.b16 %v2341
      %v2350 = vunpack.c.l.b16 %v2342
      %v2351 = vunpack.c.h.b16 %v2339
      %v2352 = vunpack.c.h.b16 %v2340
      %v2353 = vunpack.c.h.b16 %v2341
      %v2354 = vunpack.c.h.b16 %v2342
      %v2355 = vpack.c.b16 %v2348, %v2347
      %v2356 = vpack.c.b16 %v2350, %v2349
      %v2357 = vpack.c.b16 %v2352, %v2351
      %v2358 = vpack.c.b16 %v2354, %v2353
      %2363 = vst [vmem:[%s354 + $0x20] sm:$0xff] %v2355
      %2364 = vst [vmem:[%s354 + $0x28] sm:$0xff] %v2356
      %2365 = vst [vmem:[%s354 + $0x30] sm:$0xff] %v2357
      %2366 = vst [vmem:[%s354 + $0x38] sm:$0xff] %v2358
      %v2367 = vpack.c.bf16 %v2029, %v2025
      %v2368 = vpack.c.bf16 %v2030, %v2026
      %v2369 = vpack.c.bf16 %v2031, %v2027
      %v2370 = vpack.c.bf16 %v2032, %v2028
      %v2375 = vunpack.c.l.b16 %v2367
      %v2376 = vunpack.c.l.b16 %v2368
      %v2377 = vunpack.c.l.b16 %v2369
      %v2378 = vunpack.c.l.b16 %v2370
      %v2379 = vunpack.c.h.b16 %v2367
      %v2380 = vunpack.c.h.b16 %v2368
      %v2381 = vunpack.c.h.b16 %v2369
      %v2382 = vunpack.c.h.b16 %v2370
      %v2383 = vpack.c.b16 %v2376, %v2375
      %v2384 = vpack.c.b16 %v2378, %v2377
      %v2385 = vpack.c.b16 %v2380, %v2379
      %v2386 = vpack.c.b16 %v2382, %v2381
      %2391 = vst [vmem:[%s354 + $0x40] sm:$0xff] %v2383
      %2392 = vst [vmem:[%s354 + $0x48] sm:$0xff] %v2384
      %2393 = vst [vmem:[%s354 + $0x50] sm:$0xff] %v2385
      %2394 = vst [vmem:[%s354 + $0x58] sm:$0xff] %v2386
      %v2395 = vpack.c.bf16 %v2275, %v2271
      %v2396 = vpack.c.bf16 %v2276, %v2272
      %v2397 = vpack.c.bf16 %v2277, %v2273
      %v2398 = vpack.c.bf16 %v2278, %v2274
      %v2403 = vunpack.c.l.b16 %v2395
      %v2404 = vunpack.c.l.b16 %v2396
      %v2405 = vunpack.c.l.b16 %v2397
      %v2406 = vunpack.c.l.b16 %v2398
      %v2407 = vunpack.c.h.b16 %v2395
      %v2408 = vunpack.c.h.b16 %v2396
      %v2409 = vunpack.c.h.b16 %v2397
      %v2410 = vunpack.c.h.b16 %v2398
      %v2411 = vpack.c.b16 %v2404, %v2403
      %v2412 = vpack.c.b16 %v2406, %v2405
      %v2413 = vpack.c.b16 %v2408, %v2407
      %v2414 = vpack.c.b16 %v2410, %v2409
      %2419 = vst [vmem:[%s354 + $0x60] sm:$0xff] %v2411
      %2420 = vst [vmem:[%s354 + $0x68] sm:$0xff] %v2412
      %2421 = vst [vmem:[%s354 + $0x70] sm:$0xff] %v2413
      %2422 = vst [vmem:[%s354 + $0x78] sm:$0xff] %v2414
      %s2423 = smul.u32 4, %s25
      %p2424 = scmp.lt.s32.totalorder %s24, 1
      %s2425 = scalar_select %p2424, %s24, 1
      %p2426 = scmp.lt.s32.totalorder %s2423, 3
      %s2427 = scalar_select %p2426, %s2423, 3
      %s2428 = smul.addr %s2425, 32
      %s2429 = sadd.s32 %s2427, %s2428
      %s2430 = smul.addr %s2429, 4
      %s2431 = scalar_lea.vmem %s9, %s2430
      // Predicated region
      $region57: #{inception_forward.1} parent=55 // pred_check
        %p2432 = pneg %p246
      $region58: #{inception_forward.1} parent=55 // pred_check_branch
        %2434 = sbr.rel (%p2432) target = $region60
      $region59: #{inception_forward.1} parent=55 // pred_region
        %s2435 = smul.u32 4, %s25
      $region60: #{inception_forward.1} parent=55 // pred_fallthru
        _
    $region56: #{inception_forward.1} parent=5 // pred_fallthru
      _
    %p2436 = scmp.le.s32.totalorder 2, %s15
    // Predicated region
    $region61: #{inception_forward.1} parent=5 // pred_check
      %p2437 = pneg %p2436
    $region62: #{inception_forward.1} parent=5 // pred_check_branch
      %2439 = sbr.rel (%p2437) target = $region64
    $region63: #{inception_forward.1} parent=5 // pred_region
      %s2440 = ssub.s32 %s15, 2
      // Predicated region
      $region65: #{inception_forward.1} parent=63 // pred_check
        %p2441 = pneg %p252
      $region66: #{inception_forward.1} parent=63 // pred_check_branch
        %2443 = sbr.rel (%p2441) target = $region68
      $region67: #{inception_forward.1} parent=63 // pred_region
        %s2444 = smul.u32 4, %s27
        %p2445 = scmp.lt.s32.totalorder %s26, 1
        %s2446 = scalar_select %p2445, %s26, 1
        %p2447 = scmp.lt.s32.totalorder %s2444, 3
        %s2448 = scalar_select %p2447, %s2444, 3
        %s2449 = smul.addr %s2446, 32
        %s2450 = sadd.s32 %s2448, %s2449
        %s2451 = smul.addr %s2450, 4
        %s2452 = scalar_lea.vmem %s9, %s2451
      $region68: #{inception_forward.1} parent=63 // pred_fallthru
        _
    $region64: #{inception_forward.1} parent=5 // pred_fallthru
      _
  $region6: #{inception_forward.1} parent=0 // loop_footer
    %s19 = sadd.s32 1, %s15
  $region7: #{inception_forward.1} parent=0 // loop_footer_branch
    %14 = sbr.rel target = $region3
  $region8: #{inception_forward.1} parent=0 // loop_exit
    _

</llo_original>
